<compile_context>
chip_gen: v7x
topology: tpu7x:2x2x1
jax: 0.10.0
libtpu: 0.0.40
codegen_flags: <defaults>
</compile_context>

<pallas_src>
import functools

import jax
import jax.numpy as jnp
from jax.experimental import pallas as pl
from jax.experimental.pallas import tpu as pltpu

# Small, forward-consistent hyper-parameters (scaled-down from the original args).
ARGS = {'num_layers': 3, 'hidden_dim': 64, 'out_dim': 16, 'emb_dim': 10,
        'dropout': 0.4, 'num_heads': 4}
N_LAP_COLS = 3      # ['LapNumber', 'TyreLife', 'CompoundID']
N_EVENTS = 6        # ['PitStop', 'YellowFlag', 'RedFlag', 'SC', 'VSC', 'Rainfall']
N_WEATHER = 6       # weather_cols
N_IDS = 4           # ['TrackID', 'DriverID', 'TeamID', 'Year']
BN_EPS = 1e-5

NUM_LAYERS = ARGS['num_layers']
NUM_HEADS = ARGS['num_heads']
OUT_DIM = ARGS['out_dim']
LAP_DIM = ARGS['hidden_dim']              # 64
CONS_DIM = ARGS['hidden_dim'] // 2        # 32
HID = LAP_DIM + 2 * CONS_DIM              # 128 = fused hidden width = pred_dim
IN_LAP = N_LAP_COLS + N_EVENTS + 1        # 10
IN_CONS = 1 + ARGS['emb_dim'] * N_IDS     # 41 (actual forward concat width)
IN_WEATH = N_WEATHER                      # 6
IN_FUSED = IN_LAP + IN_CONS + IN_WEATH    # 57 (zero-padded to HID=128)

# Parameter slab layout (rows x 128 lanes, f32), everything stored transposed:
#   rows [l*128,(l+1)*128) : W_fused_l.T          (block-diagonal layer weight)
#   rows [384, 392)        : W_head_combined.T    (4 pre-summed heads + gating)
#   rows [392, 520)        : vector block V (128 x 128):
#       V[:, 3l+0]=bias_l  V[:, 3l+1]=bn_scale_l  V[:, 3l+2]=bn_shift_l
#       V[0:8, 3*num_layers] = head bias (4 summed biases + 4 gating biases)
OFF_HEAD = HID * NUM_LAYERS               # 384
OFF_VEC = OFF_HEAD + 2 * NUM_HEADS        # 392
SLAB_ROWS = OFF_VEC + HID                 # 520 (multiple of 8)


# ---------------------------------------------------------------------------
# Kernel
# ---------------------------------------------------------------------------
def make_kernel(num_layers, num_heads):
    def kernel(x_ref, slab_ref, out_ref):
        x = x_ref[...]                                   # (HID, tb), batch on lanes
        V = slab_ref[OFF_VEC:OFF_VEC + HID, :]           # (HID, 128) vector block

        # Fused branch stack: one lane-full 128x128 matmul per layer.
        for l in range(num_layers):
            Wt = slab_ref[l * HID:(l + 1) * HID, :]      # (HID, HID) = W_fused_l.T
            b = V[:, 3 * l + 0:3 * l + 1]                # (HID, 1)
            sc = V[:, 3 * l + 1:3 * l + 2]
            sh = V[:, 3 * l + 2:3 * l + 3]
            h = jnp.dot(Wt, x, preferred_element_type=jnp.float32) + b
            h = h * jax.nn.sigmoid(h)                    # SiLU
            x = h * sc + sh                              # BN (eval), pre-folded
            # F.dropout(training=False) is the identity.

        # Heads: one (8,128)@(128,tb) matmul. Rows 0..3 = pre-summed pred heads,
        # rows 4..7 = gating (softmax) head logits.
        Wh = slab_ref[OFF_HEAD:OFF_HEAD + 2 * num_heads, :]          # (8, HID)
        bh = V[0:2 * num_heads, 3 * num_layers:3 * num_layers + 1]   # (8, 1)
        z = jnp.dot(Wh, x, preferred_element_type=jnp.float32) + bh  # (8, tb)

        preds = [z[h:h + 1, :] for h in range(num_heads)]                 # (1, tb)
        logits = [z[num_heads + h:num_heads + h + 1, :] for h in range(num_heads)]

        # softmax(dim=-1) over the num_heads gating logits + weighted sum,
        # fully unrolled -> pure VPU/EUP on lane-dense (1, tb) rows.
        m = logits[0]
        for h in range(1, num_heads):
            m = jnp.maximum(m, logits[h])
        es = [jnp.exp(lg - m) for lg in logits]
        denom = es[0]
        acc = preds[0] * es[0]
        for h in range(1, num_heads):
            denom = denom + es[h]
            acc = acc + preds[h] * es[h]

        out_ref[...] = acc / denom                       # (1, tb) lane-dense store

    return kernel


# ---------------------------------------------------------------------------
# Host-side parameter packing (block-diag fuse + BN fold + head pre-sum)
# ---------------------------------------------------------------------------
def pack_params(params):
    act_off = {'lap': (0, LAP_DIM), 'cons': (LAP_DIM, CONS_DIM),
               'weath': (LAP_DIM + CONS_DIM, CONS_DIM)}
    in_off = {'lap': (0, IN_LAP), 'cons': (IN_LAP, IN_CONS),
              'weath': (IN_LAP + IN_CONS, IN_WEATH)}

    slab = jnp.zeros((SLAB_ROWS, HID), jnp.float32)
    V = jnp.zeros((HID, HID), jnp.float32)

    for l in range(NUM_LAYERS):
        Wf = jnp.zeros((HID, HID), jnp.float32)          # fused (in, out), block-diag
        bias = jnp.zeros((HID,), jnp.float32)
        scale = jnp.zeros((HID,), jnp.float32)
        shift = jnp.zeros((HID,), jnp.float32)
        for br in ('lap', 'cons', 'weath'):
            W, b, gamma, beta, mean, var = params[br][l]
            o, d = act_off[br]
            i0, di = in_off[br] if l == 0 else act_off[br]
            Wf = Wf.at[i0:i0 + di, o:o + d].set(W)
            sc = gamma / jnp.sqrt(var + BN_EPS)          # BN eval pre-fold
            sh = beta - mean * sc
            bias = bias.at[o:o + d].set(b)
            scale = scale.at[o:o + d].set(sc)
            shift = shift.at[o:o + d].set(sh)
        slab = slab.at[l * HID:(l + 1) * HID, :].set(Wf.T)
        V = V.at[:, 3 * l + 0].set(bias)
        V = V.at[:, 3 * l + 1].set(scale)
        V = V.at[:, 3 * l + 2].set(shift)

    # Pre-sum pred heads over out_dim (sum(x@W+b,-1) == x@W.sum(1)+b.sum())
    # and stack them with the gating head into one transposed (8, HID) block.
    Wh = jnp.zeros((2 * NUM_HEADS, HID), jnp.float32)
    bh = jnp.zeros((2 * NUM_HEADS,), jnp.float32)
    for h in range(NUM_HEADS):
        W, b = params['heads'][h]
        Wh = Wh.at[h, :].set(W.sum(axis=1))
        bh = bh.at[h].set(b.sum())
    Wp, bp = params['prob']
    Wh = Wh.at[NUM_HEADS:2 * NUM_HEADS, :].set(Wp.T)
    bh = bh.at[NUM_HEADS:2 * NUM_HEADS].set(bp)

    slab = slab.at[OFF_HEAD:OFF_HEAD + 2 * NUM_HEADS, :].set(Wh)
    V = V.at[0:2 * NUM_HEADS, 3 * NUM_LAYERS].set(bh)
    slab = slab.at[OFF_VEC:, :].set(V)
    return slab


# ---------------------------------------------------------------------------
# Wrapper
# ---------------------------------------------------------------------------
@functools.partial(jax.jit, static_argnames=('tb',))
def mh_racenet_branched(batched_lap, batched_cons, batched_weath, batched_events,
                        slab, embs, *, tb=256):
    assert tb % 128 == 0, "tb must be a multiple of 128 (batch lives on lanes)"

    # Glue (plain JAX): embedding gather + input concatenation, in torch order.
    beds = [embs[i][batched_cons[:, i]] for i in range(len(embs))]
    x_cons = jnp.concatenate([batched_cons[:, -1:].astype(jnp.float32)] + beds, axis=1)
    x_lap = jnp.concatenate([batched_lap, batched_events], axis=-1).astype(jnp.float32)
    x_weath = batched_weath.astype(jnp.float32)
    fused = jnp.concatenate([x_lap, x_cons, x_weath], axis=1)        # (B, 57)

    B = fused.shape[0]
    Bp = ((B + tb - 1) // tb) * tb
    fused = jnp.pad(fused, ((0, Bp - B), (0, HID - fused.shape[1])))  # (Bp, 128)
    xT = fused.T                                                      # (128, Bp)

    kernel = make_kernel(NUM_LAYERS, NUM_HEADS)
    out = pl.pallas_call(
        kernel,
        out_shape=jax.ShapeDtypeStruct((1, Bp), jnp.float32),
        grid=(Bp // tb,),
        in_specs=[pl.BlockSpec((HID, tb), lambda i: (0, i)),
                  pl.BlockSpec(slab.shape, lambda i: (0, 0))],
        out_specs=pl.BlockSpec((1, tb), lambda i: (0, i)),
        compiler_params=pltpu.CompilerParams(
            dimension_semantics=("parallel",)),
    )(xT, slab)
    return out[0, :B]


# ---------------------------------------------------------------------------
# Deterministic parameter construction (synthetic; not a checkpoint load)
# ---------------------------------------------------------------------------
def init_params(key, num_tracks=10, num_drivers=20, num_teams=8):
    keys = iter(jax.random.split(key, 128))

    def nrm(shape, scale=0.1):
        return scale * jax.random.normal(next(keys), shape, jnp.float32)

    def layer(d_in, d_out):
        return (nrm((d_in, d_out)), nrm((d_out,)),
                1.0 + nrm((d_out,)), nrm((d_out,)),                    # gamma, beta
                nrm((d_out,)), 1.0 + jnp.abs(nrm((d_out,))))           # mean, var

    params = {
        'lap': [layer(IN_LAP if l == 0 else LAP_DIM, LAP_DIM) for l in range(NUM_LAYERS)],
        'cons': [layer(IN_CONS if l == 0 else CONS_DIM, CONS_DIM) for l in range(NUM_LAYERS)],
        'weath': [layer(IN_WEATH if l == 0 else CONS_DIM, CONS_DIM) for l in range(NUM_LAYERS)],
        'heads': [(nrm((HID, OUT_DIM)), nrm((OUT_DIM,))) for _ in range(NUM_HEADS)],
        'prob': (nrm((HID, NUM_HEADS)), nrm((NUM_HEADS,))),
    }
    embs = [nrm((num_tracks, ARGS['emb_dim']), 1.0),
            nrm((num_drivers, ARGS['emb_dim']), 1.0),
            nrm((num_teams, ARGS['emb_dim']), 1.0),
            nrm((2, ARGS['emb_dim']), 1.0)]
    return params, embs


# Pure-JAX reference (unpacked params, un-fused math) used to validate the kernel.
def reference_forward(batched_lap, batched_cons, batched_weath, batched_events,
                      params, embs):
    beds = [embs[i][batched_cons[:, i]] for i in range(len(embs))]
    x_cons = jnp.concatenate([batched_cons[:, -1:].astype(jnp.float32)] + beds, axis=1)
    x_lap = jnp.concatenate([batched_lap, batched_events], -1).astype(jnp.float32)
    x_weath = batched_weath.astype(jnp.float32)

    def branch(x, name):
        for l in range(NUM_LAYERS):
            W, b, gamma, beta, mean, var = params[name][l]
            x = x @ W + b
            x = x * jax.nn.sigmoid(x)
            x = (x - mean) / jnp.sqrt(var + BN_EPS) * gamma + beta
        return x

    pred_in = jnp.concatenate(
        [branch(x_lap, 'lap'), branch(x_cons, 'cons'), branch(x_weath, 'weath')],
        axis=-1)

    preds = jnp.stack([(pred_in @ W + b).sum(axis=-1) for W, b in params['heads']],
                      axis=-1)
    Wp, bp = params['prob']
    probs = jax.nn.softmax(pred_in @ Wp + bp, axis=-1)
    return (preds * probs).sum(axis=-1)


if __name__ == "__main__":
    key = jax.random.PRNGKey(0)
    kp, kd = jax.random.split(key)
    params, embs = init_params(kp)
    slab = pack_params(params)

    B = 512   # two 256-wide lane tiles -> grid of 2 (keeps both v7x TCs busy)
    k1, k2, k3, k4 = jax.random.split(kd, 4)
    batched_lap = jax.random.normal(k1, (B, N_LAP_COLS + 1), jnp.float32)
    batched_events = (jax.random.uniform(k2, (B, N_EVENTS)) < 0.2).astype(jnp.float32)
    batched_weath = jax.random.normal(k3, (B, N_WEATHER), jnp.float32)
    ik = jax.random.split(k4, 5)
    batched_cons = jnp.concatenate(
        [jax.random.randint(ik[0], (B, 1), 0, 10),   # TrackID
         jax.random.randint(ik[1], (B, 1), 0, 20),   # DriverID
         jax.random.randint(ik[2], (B, 1), 0, 8),    # TeamID
         jax.random.randint(ik[3], (B, 1), 0, 2),    # Year
         jax.random.randint(ik[4], (B, 1), 0, 5)],   # extra scalar feature (last col)
        axis=1).astype(jnp.int32)

    out = mh_racenet_branched(batched_lap, batched_cons, batched_weath,
                              batched_events, slab, embs, tb=256)
    out = jax.block_until_ready(out)

    ref = reference_forward(batched_lap, batched_cons, batched_weath,
                            batched_events, params, embs)
    assert out.shape == (B,)
    max_err = float(jnp.max(jnp.abs(out - ref)))
    assert jnp.allclose(out, ref, rtol=2e-4, atol=2e-4), ("max_abs_err", max_err)
    print("KERNEL_OK")
</pallas_src>

<mosaic_0001>
module attributes {stable_mosaic.version = 11 : i64} {
  func.func @kernel(%arg0: i32, %arg1: memref<128x256xf32, #tpu.memory_space<vmem>>, %arg2: memref<520x128xf32, #tpu.memory_space<vmem>>, %arg3: memref<1x256xf32, #tpu.memory_space<vmem>>) attributes {dimension_semantics = [#tpu.dimension_semantics<parallel>], iteration_bounds = array<i64: 2>, scalar_prefetch = 0 : i64, scratch_operands = 0 : i64, tpu.core_type = #tpu.core_type<tc>, window_params = [{transform_indices = @transform_0, window_bounds = array<i64: 128, 256>}, {pipeline_mode = #tpu.pipeline_mode<synchronous>, transform_indices = @transform_1, window_bounds = array<i64: 520, 128>}, {transform_indices = @transform_2, window_bounds = array<i64: 1, 256>}]} {
    %c0 = arith.constant 0 : index
    %c0_0 = arith.constant 0 : index
    %0 = vector.load %arg1[%c0, %c0_0] : memref<128x256xf32, #tpu.memory_space<vmem>>, vector<128x256xf32>
    %c392 = arith.constant 392 : index
    %c0_1 = arith.constant 0 : index
    %1 = vector.load %arg2[%c392, %c0_1] : memref<520x128xf32, #tpu.memory_space<vmem>>, vector<128x128xf32>
    %c0_2 = arith.constant 0 : index
    %c0_3 = arith.constant 0 : index
    %2 = vector.load %arg2[%c0_2, %c0_3] : memref<520x128xf32, #tpu.memory_space<vmem>>, vector<128x128xf32>
    %3 = vector.extract_strided_slice %1 {offsets = [0, 0], sizes = [128, 1], strides = [1, 1]} : vector<128x128xf32> to vector<128x1xf32>
    %4 = vector.extract_strided_slice %1 {offsets = [0, 1], sizes = [128, 1], strides = [1, 1]} : vector<128x128xf32> to vector<128x1xf32>
    %5 = vector.extract_strided_slice %1 {offsets = [0, 2], sizes = [128, 1], strides = [1, 1]} : vector<128x128xf32> to vector<128x1xf32>
    %cst = arith.constant dense<0.000000e+00> : vector<128x256xf32>
    %6 = tpu.matmul %2, %0, %cst {dimension_numbers = #tpu.dot_dimension_numbers<[1], [0], [0], [1], [0, 0, 1, 1], [], []>} : vector<128x128xf32>, vector<128x256xf32>, vector<128x256xf32> -> vector<128x256xf32>
    %7 = vector.broadcast %3 : vector<128x1xf32> to vector<128x256xf32>
    %8 = arith.addf %6, %7 : vector<128x256xf32>
    %9 = arith.negf %8 : vector<128x256xf32>
    %10 = math.exp %9 : vector<128x256xf32>
    %cst_4 = arith.constant 1.000000e+00 : f32
    %11 = vector.broadcast %cst_4 : f32 to vector<128x256xf32>
    %12 = arith.addf %11, %10 : vector<128x256xf32>
    %13 = arith.divf %11, %12 : vector<128x256xf32>
    %14 = arith.mulf %8, %13 : vector<128x256xf32>
    %15 = vector.broadcast %4 : vector<128x1xf32> to vector<128x256xf32>
    %16 = arith.mulf %14, %15 : vector<128x256xf32>
    %17 = vector.broadcast %5 : vector<128x1xf32> to vector<128x256xf32>
    %18 = arith.addf %16, %17 : vector<128x256xf32>
    %c128 = arith.constant 128 : index
    %c0_5 = arith.constant 0 : index
    %19 = vector.load %arg2[%c128, %c0_5] : memref<520x128xf32, #tpu.memory_space<vmem>>, vector<128x128xf32>
    %20 = vector.extract_strided_slice %1 {offsets = [0, 3], sizes = [128, 1], strides = [1, 1]} : vector<128x128xf32> to vector<128x1xf32>
    %21 = vector.extract_strided_slice %1 {offsets = [0, 4], sizes = [128, 1], strides = [1, 1]} : vector<128x128xf32> to vector<128x1xf32>
    %22 = vector.extract_strided_slice %1 {offsets = [0, 5], sizes = [128, 1], strides = [1, 1]} : vector<128x128xf32> to vector<128x1xf32>
    %cst_6 = arith.constant dense<0.000000e+00> : vector<128x256xf32>
    %23 = tpu.matmul %19, %18, %cst_6 {dimension_numbers = #tpu.dot_dimension_numbers<[1], [0], [0], [1], [0, 0, 1, 1], [], []>} : vector<128x128xf32>, vector<128x256xf32>, vector<128x256xf32> -> vector<128x256xf32>
    %24 = vector.broadcast %20 : vector<128x1xf32> to vector<128x256xf32>
    %25 = arith.addf %23, %24 : vector<128x256xf32>
    %26 = arith.negf %25 : vector<128x256xf32>
    %27 = math.exp %26 : vector<128x256xf32>
    %cst_7 = arith.constant 1.000000e+00 : f32
    %28 = vector.broadcast %cst_7 : f32 to vector<128x256xf32>
    %29 = arith.addf %28, %27 : vector<128x256xf32>
    %30 = arith.divf %28, %29 : vector<128x256xf32>
    %31 = arith.mulf %25, %30 : vector<128x256xf32>
    %32 = vector.broadcast %21 : vector<128x1xf32> to vector<128x256xf32>
    %33 = arith.mulf %31, %32 : vector<128x256xf32>
    %34 = vector.broadcast %22 : vector<128x1xf32> to vector<128x256xf32>
    %35 = arith.addf %33, %34 : vector<128x256xf32>
    %c256 = arith.constant 256 : index
    %c0_8 = arith.constant 0 : index
    %36 = vector.load %arg2[%c256, %c0_8] : memref<520x128xf32, #tpu.memory_space<vmem>>, vector<128x128xf32>
    %37 = vector.extract_strided_slice %1 {offsets = [0, 6], sizes = [128, 1], strides = [1, 1]} : vector<128x128xf32> to vector<128x1xf32>
    %38 = vector.extract_strided_slice %1 {offsets = [0, 7], sizes = [128, 1], strides = [1, 1]} : vector<128x128xf32> to vector<128x1xf32>
    %39 = vector.extract_strided_slice %1 {offsets = [0, 8], sizes = [128, 1], strides = [1, 1]} : vector<128x128xf32> to vector<128x1xf32>
    %cst_9 = arith.constant dense<0.000000e+00> : vector<128x256xf32>
    %40 = tpu.matmul %36, %35, %cst_9 {dimension_numbers = #tpu.dot_dimension_numbers<[1], [0], [0], [1], [0, 0, 1, 1], [], []>} : vector<128x128xf32>, vector<128x256xf32>, vector<128x256xf32> -> vector<128x256xf32>
    %41 = vector.broadcast %37 : vector<128x1xf32> to vector<128x256xf32>
    %42 = arith.addf %40, %41 : vector<128x256xf32>
    %43 = arith.negf %42 : vector<128x256xf32>
    %44 = math.exp %43 : vector<128x256xf32>
    %cst_10 = arith.constant 1.000000e+00 : f32
    %45 = vector.broadcast %cst_10 : f32 to vector<128x256xf32>
    %46 = arith.addf %45, %44 : vector<128x256xf32>
    %47 = arith.divf %45, %46 : vector<128x256xf32>
    %48 = arith.mulf %42, %47 : vector<128x256xf32>
    %49 = vector.broadcast %38 : vector<128x1xf32> to vector<128x256xf32>
    %50 = arith.mulf %48, %49 : vector<128x256xf32>
    %51 = vector.broadcast %39 : vector<128x1xf32> to vector<128x256xf32>
    %52 = arith.addf %50, %51 : vector<128x256xf32>
    %c384 = arith.constant 384 : index
    %c0_11 = arith.constant 0 : index
    %53 = vector.load %arg2[%c384, %c0_11] : memref<520x128xf32, #tpu.memory_space<vmem>>, vector<8x128xf32>
    %54 = vector.extract_strided_slice %1 {offsets = [0, 9], sizes = [8, 1], strides = [1, 1]} : vector<128x128xf32> to vector<8x1xf32>
    %cst_12 = arith.constant dense<0.000000e+00> : vector<8x256xf32>
    %55 = tpu.matmul %53, %52, %cst_12 {dimension_numbers = #tpu.dot_dimension_numbers<[1], [0], [0], [1], [0, 0, 1, 1], [], []>} : vector<8x128xf32>, vector<128x256xf32>, vector<8x256xf32> -> vector<8x256xf32>
    %56 = vector.broadcast %54 : vector<8x1xf32> to vector<8x256xf32>
    %57 = arith.addf %55, %56 : vector<8x256xf32>
    %58 = vector.extract_strided_slice %57 {offsets = [0, 0], sizes = [1, 256], strides = [1, 1]} : vector<8x256xf32> to vector<1x256xf32>
    %59 = vector.extract_strided_slice %57 {offsets = [1, 0], sizes = [1, 256], strides = [1, 1]} : vector<8x256xf32> to vector<1x256xf32>
    %60 = vector.extract_strided_slice %57 {offsets = [2, 0], sizes = [1, 256], strides = [1, 1]} : vector<8x256xf32> to vector<1x256xf32>
    %61 = vector.extract_strided_slice %57 {offsets = [3, 0], sizes = [1, 256], strides = [1, 1]} : vector<8x256xf32> to vector<1x256xf32>
    %62 = vector.extract_strided_slice %57 {offsets = [4, 0], sizes = [1, 256], strides = [1, 1]} : vector<8x256xf32> to vector<1x256xf32>
    %63 = vector.extract_strided_slice %57 {offsets = [5, 0], sizes = [1, 256], strides = [1, 1]} : vector<8x256xf32> to vector<1x256xf32>
    %64 = vector.extract_strided_slice %57 {offsets = [6, 0], sizes = [1, 256], strides = [1, 1]} : vector<8x256xf32> to vector<1x256xf32>
    %65 = vector.extract_strided_slice %57 {offsets = [7, 0], sizes = [1, 256], strides = [1, 1]} : vector<8x256xf32> to vector<1x256xf32>
    %66 = arith.maximumf %62, %63 : vector<1x256xf32>
    %67 = arith.maximumf %66, %64 : vector<1x256xf32>
    %68 = arith.maximumf %67, %65 : vector<1x256xf32>
    %69 = arith.subf %62, %68 : vector<1x256xf32>
    %70 = math.exp %69 : vector<1x256xf32>
    %71 = arith.subf %63, %68 : vector<1x256xf32>
    %72 = math.exp %71 : vector<1x256xf32>
    %73 = arith.subf %64, %68 : vector<1x256xf32>
    %74 = math.exp %73 : vector<1x256xf32>
    %75 = arith.subf %65, %68 : vector<1x256xf32>
    %76 = math.exp %75 : vector<1x256xf32>
    %77 = arith.mulf %58, %70 : vector<1x256xf32>
    %78 = arith.addf %70, %72 : vector<1x256xf32>
    %79 = arith.mulf %59, %72 : vector<1x256xf32>
    %80 = arith.addf %77, %79 : vector<1x256xf32>
    %81 = arith.addf %78, %74 : vector<1x256xf32>
    %82 = arith.mulf %60, %74 : vector<1x256xf32>
    %83 = arith.addf %80, %82 : vector<1x256xf32>
    %84 = arith.addf %81, %76 : vector<1x256xf32>
    %85 = arith.mulf %61, %76 : vector<1x256xf32>
    %86 = arith.addf %83, %85 : vector<1x256xf32>
    %87 = arith.divf %86, %84 : vector<1x256xf32>
    %c0_13 = arith.constant 0 : index
    %c0_14 = arith.constant 0 : index
    %88 = vector.load %arg3[%c0_13, %c0_14] : memref<1x256xf32, #tpu.memory_space<vmem>>, vector<1x256xf32>
    tpu.vector_store %arg3[%c0_13, %c0_14], %87 {strides = array<i32>} : memref<1x256xf32, #tpu.memory_space<vmem>>, vector<1x256xf32>,
    return
  }
  func.func @transform_0(%arg0: i32) -> (i32, i32) {
    %c0_i32 = arith.constant 0 : i32
    %c0_i32_0 = arith.constant 0 : i32
    return %c0_i32, %arg0 : i32, i32
  }
  func.func @transform_1(%arg0: i32) -> (i32, i32) {
    %c0_i32 = arith.constant 0 : i32
    %c0_i32_0 = arith.constant 0 : i32
    %c0_i32_1 = arith.constant 0 : i32
    return %c0_i32, %c0_i32_0 : i32, i32
  }
  func.func @transform_2(%arg0: i32) -> (i32, i32) {
    %c0_i32 = arith.constant 0 : i32
    %c0_i32_0 = arith.constant 0 : i32
    return %c0_i32, %arg0 : i32, i32
  }
}

</mosaic_0001>

<llo_original>
// kernel: mh_racenet_branched.1
$region0: #{mh_racenet_branched.1}
  #allocation0 [shape = 'u32[]', space=smem, size = 0x4, offset = 0x4, fixed_abs, tag = 'smem constant byte address 0x4 - core index']
  #allocation1 [shape = 'u32[144,128]{1,0:T(1,128)}', space=vmem, size = 0x12000, scoped, tag = 'internal scratch']
  %s0 = inlined_call_operand.vmem [shape: f32[128,512], index: 0, kind: input, shape index: {}]
  %s1 = inlined_call_operand.vmem [shape: f32[520,128], index: 1, kind: input, shape index: {}]
  %s2 = inlined_call_operand.hbm [shape: f32[1,512], index: 2, kind: output, shape index: {}]
  %s3 = sld [smem:[#allocation0]]
  $region64: #{mh_racenet_branched.1} parent=0
    _
  %s5 = ssub.s32 1, %s3
  %s6 = scalar_select 0, %s5, %s3
  $region1: #{mh_racenet_branched.1} parent=0
    #allocation2 [shape = 'u8[262144]{0}', space=vmem, size = 0x40000, scoped, tag = 'input window, operand 0']
    #allocation3 [shape = 'u8[2048]{0}', space=vmem, size = 0x800, scoped, tag = 'output window, operand 0']
    #allocation4 [shape = 's32[2]{0}', space=sflag, size = 0x8, scoped, tag = 'scoped memory for mh_racenet_branched.1']
    %7 = vsyncpa [#allocation4], 0
    %s8 = scalar_lea.sflag [#allocation4], 1
    %9 = vsyncpa %s8, 0
    loop: start=0, step=1, limit=4
    $region2: #{mh_racenet_branched.1} parent=1 // loop_pre_header
      _
    $region3: #{mh_racenet_branched.1} parent=1 // loop_header
      %s11 = sphi 0, %s15
      %p12 = scmp.ge.s32.totalorder %s11, 4
      %s21 = sphi 0, %s23
      %s24 = sphi 0, %s21
      %s25 = sphi 0, %s24
      %s41 = sphi 0, %s25
      %s45 = sphi 0, %s45
      %s47 = sphi 0, %s45
      %s48 = sphi 0, %s47
      %s62 = sphi 0, %s48
      %s68 = sphi 0, %s70
      %s71 = sphi 0, %s68
      %s72 = sphi 0, %s71
      %s88 = sphi 0, %s72
    $region4: #{mh_racenet_branched.1} parent=1 // loop_header_branch
      %14 = sbr.rel (%p12) target = $region8
    $region5: #{mh_racenet_branched.1} parent=1 // loop_body
      %s16 = ssub.s32 %s11, 1
      %s17 = ssub.s32 %s11, 2
      %s18 = sadd.s32 %s11, 1
      %s19 = ssub.s32 %s11, %s18
      %p20 = scmp.eq.s32.totalorder %s19, 0
      %s22 = sadd.s32 %s21, 1
      %s23 = scalar_select %p20, %s21, %s22
      %p26 = pneg %p20
      %p27 = scmp.eq.s32.totalorder %s11, 1
      %p28 = por %p26, %p27
      %p29 = scmp.ne.s32.totalorder %s21, %s24
      %p30 = scmp.eq.s32.totalorder %s11, 0
      %p31 = por %p29, %p30
      %p32 = scmp.ne.s32.totalorder %s21, %s24
      %p33 = scmp.eq.s32.totalorder %s16, 1
      %p34 = por %p32, %p33
      %p35 = scmp.ne.s32.totalorder %s24, %s25
      %p36 = scmp.eq.s32.totalorder %s16, 0
      %p37 = por %p35, %p36
      %p38 = scmp.ne.s32.totalorder %s24, %s25
      %p39 = scmp.eq.s32.totalorder %s17, 1
      %p40 = por %p38, %p39
      %p42 = scmp.ne.s32.totalorder %s25, %s41
      %p43 = scmp.eq.s32.totalorder %s17, 0
      %p44 = por %p42, %p43
      %s46 = sadd.s32 %s45, 1
      %p49 = scmp.eq.s32.totalorder %s11, 1
      %p50 = scmp.ne.s32.totalorder %s45, %s47
      %p51 = scmp.eq.s32.totalorder %s11, 0
      %p52 = por %p50, %p51
      %p53 = scmp.ne.s32.totalorder %s45, %s47
      %p54 = scmp.eq.s32.totalorder %s16, 1
      %p55 = por %p53, %p54
      %p56 = scmp.ne.s32.totalorder %s47, %s48
      %p57 = scmp.eq.s32.totalorder %s16, 0
      %p58 = por %p56, %p57
      %p59 = scmp.ne.s32.totalorder %s47, %s48
      %p60 = scmp.eq.s32.totalorder %s17, 1
      %p61 = por %p59, %p60
      %p63 = scmp.ne.s32.totalorder %s48, %s62
      %p64 = scmp.eq.s32.totalorder %s17, 0
      %p65 = por %p63, %p64
      %s66 = ssub.s32 %s11, %s18
      %p67 = scmp.eq.s32.totalorder %s66, 0
      %s69 = sadd.s32 %s68, 1
      %s70 = scalar_select %p67, %s68, %s69
      %p73 = pneg %p67
      %p74 = scmp.eq.s32.totalorder %s11, 1
      %p75 = por %p73, %p74
      %p76 = scmp.ne.s32.totalorder %s68, %s71
      %p77 = scmp.eq.s32.totalorder %s11, 0
      %p78 = por %p76, %p77
      %p79 = scmp.ne.s32.totalorder %s68, %s71
      %p80 = scmp.eq.s32.totalorder %s16, 1
      %p81 = por %p79, %p80
      %p82 = scmp.ne.s32.totalorder %s71, %s72
      %p83 = scmp.eq.s32.totalorder %s16, 0
      %p84 = por %p82, %p83
      %p85 = scmp.ne.s32.totalorder %s71, %s72
      %p86 = scmp.eq.s32.totalorder %s17, 1
      %p87 = por %p85, %p86
      %p89 = scmp.ne.s32.totalorder %s72, %s88
      %p90 = scmp.eq.s32.totalorder %s17, 0
      %p91 = por %p89, %p90
      %p92 = scmp.le.s32.totalorder 1, %s11
      %p93 = scmp.lt.s32.totalorder %s11, 3
      %p94 = pnand %p92, %p93
      %p95 = pneg %p94
      // Predicated region
      $region9: #{mh_racenet_branched.1} parent=5 // pred_check
        _
      $region10: #{mh_racenet_branched.1} parent=5 // pred_check_branch
        %97 = sbr.rel (%p94) target = $region12
      $region11: #{mh_racenet_branched.1} parent=5 // pred_region
        %s98 = ssub.s32 %s11, 1
        // Predicated region
        $region13: #{mh_racenet_branched.1} parent=11 // pred_check
          %p99 = pneg %p58
        $region14: #{mh_racenet_branched.1} parent=11 // pred_check_branch
          %101 = sbr.rel (%p99) target = $region16
        $region15: #{mh_racenet_branched.1} parent=11 // pred_region
          _
        $region16: #{mh_racenet_branched.1} parent=11 // pred_fallthru
          _
      $region12: #{mh_racenet_branched.1} parent=5 // pred_fallthru
        _
      %p102 = scmp.lt.s32.totalorder %s11, 2
      // Predicated region
      $region17: #{mh_racenet_branched.1} parent=5 // pred_check
        %p103 = pneg %p102
      $region18: #{mh_racenet_branched.1} parent=5 // pred_check_branch
        %105 = sbr.rel (%p103) target = $region20
      $region19: #{mh_racenet_branched.1} parent=5 // pred_region
        // Predicated region
        $region21: #{mh_racenet_branched.1} parent=19 // pred_check
          %p106 = pneg %p31
        $region22: #{mh_racenet_branched.1} parent=19 // pred_check_branch
          %108 = sbr.rel (%p106) target = $region24
        $region23: #{mh_racenet_branched.1} parent=19 // pred_region
          %s109 = sand.u32 %s21, 1
          %s110 = sand.u32 %s21, 1
          %s111 = smul.addr %s110, 256
          %s112 = scalar_lea.vmem [#allocation2], %s111
          %s113 = smul.u32 2, %s11
          %s114 = smul.addr %s113, 8
          %s115 = scalar_lea.vmem %s0, %s114
          // Predicated region
          $region25: #{mh_racenet_branched.1} parent=23 // pred_check
            _
          $region26: #{mh_racenet_branched.1} parent=23 // pred_check_branch
            %117 = sbr.rel (0) target = $region28
          $region27: #{mh_racenet_branched.1} parent=23 // pred_region
            // Predicated region
            $region29: #{mh_racenet_branched.1} parent=27 // pred_check
              _
            $region30: #{mh_racenet_branched.1} parent=27 // pred_check_branch
              %119 = sbr.rel (0) target = $region32
            $region31: #{mh_racenet_branched.1} parent=27 // pred_region
              loop: start=0, step=1, limit=1
              $region33: #{mh_racenet_branched.1} parent=31 // loop_pre_header
                _
              $region34: #{mh_racenet_branched.1} parent=31 // loop_header
                %s121 = sphi 0, %s125
                %p122 = scmp.ge.s32.totalorder %s121, 1
                %s126 = sphi %s115, %s115
                %s127 = sphi %s112, %s112
              $region35: #{mh_racenet_branched.1} parent=31 // loop_header_branch
                %124 = sbr.rel (%p122) target = $region39
              $region36: #{mh_racenet_branched.1} parent=31 // loop_body
                %v128 = vld [vmem:[%s126] sm:$0xff]
                %129 = vst [vmem:[%s127] sm:$0xff] %v128
                %v130 = vld [vmem:[%s126 + $0x8] sm:$0xff]
                %131 = vst [vmem:[%s127 + $0x8] sm:$0xff] %v130
                %v132 = vld [vmem:[%s126 + $0x20] sm:$0xff]
                %133 = vst [vmem:[%s127 + $0x10] sm:$0xff] %v132
                %v134 = vld [vmem:[%s126 + $0x28] sm:$0xff]
                %135 = vst [vmem:[%s127 + $0x18] sm:$0xff] %v134
                %v136 = vld [vmem:[%s126 + $0x40] sm:$0xff]
                %137 = vst [vmem:[%s127 + $0x20] sm:$0xff] %v136
                %v138 = vld [vmem:[%s126 + $0x48] sm:$0xff]
                %139 = vst [vmem:[%s127 + $0x28] sm:$0xff] %v138
                %v140 = vld [vmem:[%s126 + $0x60] sm:$0xff]
                %141 = vst [vmem:[%s127 + $0x30] sm:$0xff] %v140
                %v142 = vld [vmem:[%s126 + $0x68] sm:$0xff]
                %143 = vst [vmem:[%s127 + $0x38] sm:$0xff] %v142
                %v144 = vld [vmem:[%s126 + $0x80] sm:$0xff]
                %145 = vst [vmem:[%s127 + $0x40] sm:$0xff] %v144
                %v146 = vld [vmem:[%s126 + $0x88] sm:$0xff]
                %147 = vst [vmem:[%s127 + $0x48] sm:$0xff] %v146
                %v148 = vld [vmem:[%s126 + $0xa0] sm:$0xff]
                %149 = vst [vmem:[%s127 + $0x50] sm:$0xff] %v148
                %v150 = vld [vmem:[%s126 + $0xa8] sm:$0xff]
                %151 = vst [vmem:[%s127 + $0x58] sm:$0xff] %v150
                %v152 = vld [vmem:[%s126 + $0xc0] sm:$0xff]
                %153 = vst [vmem:[%s127 + $0x60] sm:$0xff] %v152
                %v154 = vld [vmem:[%s126 + $0xc8] sm:$0xff]
                %155 = vst [vmem:[%s127 + $0x68] sm:$0xff] %v154
                %v156 = vld [vmem:[%s126 + $0xe0] sm:$0xff]
                %157 = vst [vmem:[%s127 + $0x70] sm:$0xff] %v156
                %v158 = vld [vmem:[%s126 + $0xe8] sm:$0xff]
                %159 = vst [vmem:[%s127 + $0x78] sm:$0xff] %v158
                %v160 = vld [vmem:[%s126 + $0x100] sm:$0xff]
                %161 = vst [vmem:[%s127 + $0x80] sm:$0xff] %v160
                %v162 = vld [vmem:[%s126 + $0x108] sm:$0xff]
                %163 = vst [vmem:[%s127 + $0x88] sm:$0xff] %v162
                %v164 = vld [vmem:[%s126 + $0x120] sm:$0xff]
                %165 = vst [vmem:[%s127 + $0x90] sm:$0xff] %v164
                %v166 = vld [vmem:[%s126 + $0x128] sm:$0xff]
                %167 = vst [vmem:[%s127 + $0x98] sm:$0xff] %v166
                %v168 = vld [vmem:[%s126 + $0x140] sm:$0xff]
                %169 = vst [vmem:[%s127 + $0xa0] sm:$0xff] %v168
                %v170 = vld [vmem:[%s126 + $0x148] sm:$0xff]
                %171 = vst [vmem:[%s127 + $0xa8] sm:$0xff] %v170
                %v172 = vld [vmem:[%s126 + $0x160] sm:$0xff]
                %173 = vst [vmem:[%s127 + $0xb0] sm:$0xff] %v172
                %v174 = vld [vmem:[%s126 + $0x168] sm:$0xff]
                %175 = vst [vmem:[%s127 + $0xb8] sm:$0xff] %v174
                %v176 = vld [vmem:[%s126 + $0x180] sm:$0xff]
                %177 = vst [vmem:[%s127 + $0xc0] sm:$0xff] %v176
                %v178 = vld [vmem:[%s126 + $0x188] sm:$0xff]
                %179 = vst [vmem:[%s127 + $0xc8] sm:$0xff] %v178
                %v180 = vld [vmem:[%s126 + $0x1a0] sm:$0xff]
                %181 = vst [vmem:[%s127 + $0xd0] sm:$0xff] %v180
                %v182 = vld [vmem:[%s126 + $0x1a8] sm:$0xff]
                %183 = vst [vmem:[%s127 + $0xd8] sm:$0xff] %v182
                %v184 = vld [vmem:[%s126 + $0x1c0] sm:$0xff]
                %185 = vst [vmem:[%s127 + $0xe0] sm:$0xff] %v184
                %v186 = vld [vmem:[%s126 + $0x1c8] sm:$0xff]
                %187 = vst [vmem:[%s127 + $0xe8] sm:$0xff] %v186
                %v188 = vld [vmem:[%s126 + $0x1e0] sm:$0xff]
                %189 = vst [vmem:[%s127 + $0xf0] sm:$0xff] %v188
                %v190 = vld [vmem:[%s126 + $0x1e8] sm:$0xff]
                %191 = vst [vmem:[%s127 + $0xf8] sm:$0xff] %v190
              $region37: #{mh_racenet_branched.1} parent=31 // loop_footer
                %s125 = sadd.s32 1, %s121
              $region38: #{mh_racenet_branched.1} parent=31 // loop_footer_branch
                %120 = sbr.rel target = $region34
              $region39: #{mh_racenet_branched.1} parent=31 // loop_exit
                _
            $region32: #{mh_racenet_branched.1} parent=27 // pred_fallthru
              _
            // Predicated region
            $region40: #{mh_racenet_branched.1} parent=27 // pred_check
              _
            $region41: #{mh_racenet_branched.1} parent=27 // pred_check_branch
              %193 = sbr.rel target = $region43
            $region42: #{mh_racenet_branched.1} parent=27 // pred_region
              _
            $region43: #{mh_racenet_branched.1} parent=27 // pred_fallthru
              _
          $region28: #{mh_racenet_branched.1} parent=23 // pred_fallthru
            _
          %194 = vnop
        $region24: #{mh_racenet_branched.1} parent=19 // pred_fallthru
          _
      $region20: #{mh_racenet_branched.1} parent=5 // pred_fallthru
        _
      %p195 = scmp.le.s32.totalorder 1, %s11
      %p196 = scmp.lt.s32.totalorder %s11, 3
      %p197 = pnand %p195, %p196
      %p198 = pneg %p197
      // Predicated region
      $region44: #{mh_racenet_branched.1} parent=5 // pred_check
        _
      $region45: #{mh_racenet_branched.1} parent=5 // pred_check_branch
        %200 = sbr.rel (%p197) target = $region47
      $region46: #{mh_racenet_branched.1} parent=5 // pred_region
        %s201 = ssub.s32 %s11, 1
        %s202 = sand.u32 %s24, 1
        %s203 = sand.u32 %s24, 1
        %s204 = smul.addr %s203, 256
        %s205 = scalar_lea.vmem [#allocation2], %s204
        // Predicated region
        $region48: #{mh_racenet_branched.1} parent=46 // pred_check
          %p206 = pneg %p37
        $region49: #{mh_racenet_branched.1} parent=46 // pred_check_branch
          %208 = sbr.rel (%p206) target = $region51
        $region50: #{mh_racenet_branched.1} parent=46 // pred_region
          _
        $region51: #{mh_racenet_branched.1} parent=46 // pred_fallthru
          _
        %s209 = sand.u32 %s24, 1
        %s210 = sand.u32 %s24, 1
        %s211 = smul.addr %s210, 256
        %s212 = scalar_lea.vmem [#allocation2], %s211
        %p213 = pneg %p37
        %p214 = pneg %p34
        %p215 = pneg %p58
        %p216 = pneg %p55
        %p217 = pneg %p84
        %p218 = pneg %p81
        %s219 = sand.u32 %s71, 1
        %s220 = scalar_lea.sflag [#allocation4], %s219
        %s221 = sand.u32 %s71, 1
        %s222 = smul.addr %s221, 2
        %s223 = scalar_lea.vmem [#allocation3], %s222
        %s224 = smul.u32 2, %s16
        %s225 = smul.u32 2, %s16
        %v226 = vld [vmem:[%s205] sm:$0xff]
        %v227 = vld [vmem:[%s205 + $0x8] sm:$0xff]
        %v228 = vld [vmem:[%s205 + $0x10] sm:$0xff]
        %v229 = vld [vmem:[%s205 + $0x18] sm:$0xff]
        %v230 = vld [vmem:[%s205 + $0x20] sm:$0xff]
        %v231 = vld [vmem:[%s205 + $0x28] sm:$0xff]
        %v232 = vld [vmem:[%s205 + $0x30] sm:$0xff]
        %v233 = vld [vmem:[%s205 + $0x38] sm:$0xff]
        %v234 = vld [vmem:[%s205 + $0x40] sm:$0xff]
        %v235 = vld [vmem:[%s205 + $0x48] sm:$0xff]
        %v236 = vld [vmem:[%s205 + $0x50] sm:$0xff]
        %v237 = vld [vmem:[%s205 + $0x58] sm:$0xff]
        %v238 = vld [vmem:[%s205 + $0x60] sm:$0xff]
        %v239 = vld [vmem:[%s205 + $0x68] sm:$0xff]
        %v240 = vld [vmem:[%s205 + $0x70] sm:$0xff]
        %v241 = vld [vmem:[%s205 + $0x78] sm:$0xff]
        %v242 = vld [vmem:[%s205 + $0x80] sm:$0xff]
        %v243 = vld [vmem:[%s205 + $0x88] sm:$0xff]
        %v244 = vld [vmem:[%s205 + $0x90] sm:$0xff]
        %v245 = vld [vmem:[%s205 + $0x98] sm:$0xff]
        %v246 = vld [vmem:[%s205 + $0xa0] sm:$0xff]
        %v247 = vld [vmem:[%s205 + $0xa8] sm:$0xff]
        %v248 = vld [vmem:[%s205 + $0xb0] sm:$0xff]
        %v249 = vld [vmem:[%s205 + $0xb8] sm:$0xff]
        %v250 = vld [vmem:[%s205 + $0xc0] sm:$0xff]
        %v251 = vld [vmem:[%s205 + $0xc8] sm:$0xff]
        %v252 = vld [vmem:[%s205 + $0xd0] sm:$0xff]
        %v253 = vld [vmem:[%s205 + $0xd8] sm:$0xff]
        %v254 = vld [vmem:[%s205 + $0xe0] sm:$0xff]
        %v255 = vld [vmem:[%s205 + $0xe8] sm:$0xff]
        %v256 = vld [vmem:[%s205 + $0xf0] sm:$0xff]
        %v257 = vld [vmem:[%s205 + $0xf8] sm:$0xff]
        %v258 = vld [vmem:[%s1 + $0x188] sm:$0xff]
        %v259 = vld [vmem:[%s1 + $0x190] sm:$0xff]
        %v260 = vld [vmem:[%s1 + $0x198] sm:$0xff]
        %v261 = vld [vmem:[%s1 + $0x1a0] sm:$0xff]
        %v262 = vld [vmem:[%s1 + $0x1a8] sm:$0xff]
        %v263 = vld [vmem:[%s1 + $0x1b0] sm:$0xff]
        %v264 = vld [vmem:[%s1 + $0x1b8] sm:$0xff]
        %v265 = vld [vmem:[%s1 + $0x1c0] sm:$0xff]
        %v266 = vld [vmem:[%s1 + $0x1c8] sm:$0xff]
        %v267 = vld [vmem:[%s1 + $0x1d0] sm:$0xff]
        %v268 = vld [vmem:[%s1 + $0x1d8] sm:$0xff]
        %v269 = vld [vmem:[%s1 + $0x1e0] sm:$0xff]
        %v270 = vld [vmem:[%s1 + $0x1e8] sm:$0xff]
        %v271 = vld [vmem:[%s1 + $0x1f0] sm:$0xff]
        %v272 = vld [vmem:[%s1 + $0x1f8] sm:$0xff]
        %v273 = vld [vmem:[%s1 + $0x200] sm:$0xff]
        %v274 = vld [vmem:[%s1] sm:$0xff]
        %v275 = vld [vmem:[%s1 + $0x8] sm:$0xff]
        %v276 = vld [vmem:[%s1 + $0x10] sm:$0xff]
        %v277 = vld [vmem:[%s1 + $0x18] sm:$0xff]
        %v278 = vld [vmem:[%s1 + $0x20] sm:$0xff]
        %v279 = vld [vmem:[%s1 + $0x28] sm:$0xff]
        %v280 = vld [vmem:[%s1 + $0x30] sm:$0xff]
        %v281 = vld [vmem:[%s1 + $0x38] sm:$0xff]
        %v282 = vld [vmem:[%s1 + $0x40] sm:$0xff]
        %v283 = vld [vmem:[%s1 + $0x48] sm:$0xff]
        %v284 = vld [vmem:[%s1 + $0x50] sm:$0xff]
        %v285 = vld [vmem:[%s1 + $0x58] sm:$0xff]
        %v286 = vld [vmem:[%s1 + $0x60] sm:$0xff]
        %v287 = vld [vmem:[%s1 + $0x68] sm:$0xff]
        %v288 = vld [vmem:[%s1 + $0x70] sm:$0xff]
        %v289 = vld [vmem:[%s1 + $0x78] sm:$0xff]
        %291 = vset.pattern.permute.xlu0 0
        %292 = vperm.xlu0 %291, %v258
        %v293 = vpop.permute.xlu0 %292
        %296 = vset.pattern.permute.xlu0 0
        %297 = vperm.xlu0 %296, %v259
        %v298 = vpop.permute.xlu0 %297
        %301 = vset.pattern.permute.xlu0 0
        %302 = vperm.xlu0 %301, %v260
        %v303 = vpop.permute.xlu0 %302
        %306 = vset.pattern.permute.xlu0 0
        %307 = vperm.xlu0 %306, %v261
        %v308 = vpop.permute.xlu0 %307
        %311 = vset.pattern.permute.xlu0 0
        %312 = vperm.xlu0 %311, %v262
        %v313 = vpop.permute.xlu0 %312
        %316 = vset.pattern.permute.xlu0 0
        %317 = vperm.xlu0 %316, %v263
        %v318 = vpop.permute.xlu0 %317
        %321 = vset.pattern.permute.xlu0 0
        %322 = vperm.xlu0 %321, %v264
        %v323 = vpop.permute.xlu0 %322
        %326 = vset.pattern.permute.xlu0 0
        %327 = vperm.xlu0 %326, %v265
        %v328 = vpop.permute.xlu0 %327
        %331 = vset.pattern.permute.xlu0 0
        %332 = vperm.xlu0 %331, %v266
        %v333 = vpop.permute.xlu0 %332
        %336 = vset.pattern.permute.xlu0 0
        %337 = vperm.xlu0 %336, %v267
        %v338 = vpop.permute.xlu0 %337
        %341 = vset.pattern.permute.xlu0 0
        %342 = vperm.xlu0 %341, %v268
        %v343 = vpop.permute.xlu0 %342
        %346 = vset.pattern.permute.xlu0 0
        %347 = vperm.xlu0 %346, %v269
        %v348 = vpop.permute.xlu0 %347
        %351 = vset.pattern.permute.xlu0 0
        %352 = vperm.xlu0 %351, %v270
        %v353 = vpop.permute.xlu0 %352
        %356 = vset.pattern.permute.xlu0 0
        %357 = vperm.xlu0 %356, %v271
        %v358 = vpop.permute.xlu0 %357
        %361 = vset.pattern.permute.xlu0 0
        %362 = vperm.xlu0 %361, %v272
        %v363 = vpop.permute.xlu0 %362
        %366 = vset.pattern.permute.xlu0 0
        %367 = vperm.xlu0 %366, %v273
        %v368 = vpop.permute.xlu0 %367
        %370 = vmatprep.subr.mxu0 %v227
        %371 = vmatpush1.msra.mxu0 %v226
        %372 = vmatprep.subr.mxu0 %v229
        %373 = vmatpush1.msra.mxu0 %v228
        %374 = vmatprep.subr.mxu0 %v231
        %375 = vmatpush1.msra.mxu0 %v230
        %376 = vmatprep.subr.mxu0 %v233
        %377 = vmatpush1.msra.mxu0 %v232
        %378 = vmatprep.subr.mxu0 %v235
        %379 = vmatpush1.msra.mxu0 %v234
        %380 = vmatprep.subr.mxu0 %v237
        %381 = vmatpush1.msra.mxu0 %v236
        %382 = vmatprep.subr.mxu0 %v239
        %383 = vmatpush1.msra.mxu0 %v238
        %384 = vmatprep.subr.mxu0 %v241
        %385 = vmatpush1.msra.mxu0 %v240
        %386 = vmatprep.subr.mxu0 %v243
        %387 = vmatpush1.msra.mxu0 %v242
        %388 = vmatprep.subr.mxu0 %v245
        %389 = vmatpush1.msra.mxu0 %v244
        %390 = vmatprep.subr.mxu0 %v247
        %391 = vmatpush1.msra.mxu0 %v246
        %392 = vmatprep.subr.mxu0 %v249
        %393 = vmatpush1.msra.mxu0 %v248
        %394 = vmatprep.subr.mxu0 %v251
        %395 = vmatpush1.msra.mxu0 %v250
        %396 = vmatprep.subr.mxu0 %v253
        %397 = vmatpush1.msra.mxu0 %v252
        %398 = vmatprep.subr.mxu0 %v255
        %399 = vmatpush1.msra.mxu0 %v254
        %400 = vmatprep.subr.mxu0 %v257
        %401 = vmatpush1.msra.mxu0 %v256
        %402 = vmatprep.subr.mxu0 0.0
        %403 = vmatpush1.msra.mxu0 0.0
        %404 = vmatprep.subr.mxu0 0.0
        %405 = vmatpush1.msra.mxu0 0.0
        %406 = vmatprep.subr.mxu0 0.0
        %407 = vmatpush1.msra.mxu0 0.0
        %408 = vmatprep.subr.mxu0 0.0
        %409 = vmatpush1.msra.mxu0 0.0
        %410 = vmatprep.subr.mxu0 0.0
        %411 = vmatpush1.msra.mxu0 0.0
        %412 = vmatprep.subr.mxu0 0.0
        %413 = vmatpush1.msra.mxu0 0.0
        %414 = vmatprep.subr.mxu0 0.0
        %415 = vmatpush1.msra.mxu0 0.0
        %416 = vmatprep.subr.mxu0 0.0
        %417 = vmatpush1.msra.mxu0 0.0
        %418 = vmatprep.subr.mxu0 0.0
        %419 = vmatpush1.msra.mxu0 0.0
        %420 = vmatprep.subr.mxu0 0.0
        %421 = vmatpush1.msra.mxu0 0.0
        %422 = vmatprep.subr.mxu0 0.0
        %423 = vmatpush1.msra.mxu0 0.0
        %424 = vmatprep.subr.mxu0 0.0
        %425 = vmatpush1.msra.mxu0 0.0
        %426 = vmatprep.subr.mxu0 0.0
        %427 = vmatpush1.msra.mxu0 0.0
        %428 = vmatprep.subr.mxu0 0.0
        %429 = vmatpush1.msra.mxu0 0.0
        %430 = vmatprep.subr.mxu0 0.0
        %431 = vmatpush1.msra.mxu0 0.0
        %432 = vmatprep.subr.mxu0 0.0
        %433 = vmatpush1.msra.mxu0 0.0
        %434 = vmatprep.mubr.f32.mxu0 0.0
        %435 = vmatmul.mubr.f32.gmra.mrb[0].mxu0 %v274
        %v436 = vpop.f32.mrb[0].mxu0
        %v437 = vadd.f32 %v293, %v436
        %v438 = vpop.f32.mrb[0].mxu0
        %v439 = vadd.f32 %v293, %v438
        %440 = vmatprep.mubr.f32.mxu0 0.0
        %441 = vmatmul.mubr.f32.gmra.mrb[0].mxu0 %v275
        %v442 = vpop.f32.mrb[0].mxu0
        %v443 = vadd.f32 %v298, %v442
        %v444 = vpop.f32.mrb[0].mxu0
        %v445 = vadd.f32 %v298, %v444
        %446 = vmatprep.mubr.f32.mxu0 0.0
        %447 = vmatmul.mubr.f32.gmra.mrb[0].mxu0 %v276
        %v448 = vpop.f32.mrb[0].mxu0
        %v449 = vadd.f32 %v303, %v448
        %v450 = vpop.f32.mrb[0].mxu0
        %v451 = vadd.f32 %v303, %v450
        %452 = vmatprep.mubr.f32.mxu0 0.0
        %453 = vmatmul.mubr.f32.gmra.mrb[0].mxu0 %v277
        %v454 = vpop.f32.mrb[0].mxu0
        %v455 = vadd.f32 %v308, %v454
        %v456 = vpop.f32.mrb[0].mxu0
        %v457 = vadd.f32 %v308, %v456
        %458 = vmatprep.mubr.f32.mxu0 0.0
        %459 = vmatmul.mubr.f32.gmra.mrb[0].mxu0 %v278
        %v460 = vpop.f32.mrb[0].mxu0
        %v461 = vadd.f32 %v313, %v460
        %v462 = vpop.f32.mrb[0].mxu0
        %v463 = vadd.f32 %v313, %v462
        %464 = vmatprep.mubr.f32.mxu0 0.0
        %465 = vmatmul.mubr.f32.gmra.mrb[0].mxu0 %v279
        %v466 = vpop.f32.mrb[0].mxu0
        %v467 = vadd.f32 %v318, %v466
        %v468 = vpop.f32.mrb[0].mxu0
        %v469 = vadd.f32 %v318, %v468
        %470 = vmatprep.mubr.f32.mxu0 0.0
        %471 = vmatmul.mubr.f32.gmra.mrb[0].mxu0 %v280
        %v472 = vpop.f32.mrb[0].mxu0
        %v473 = vadd.f32 %v323, %v472
        %v474 = vpop.f32.mrb[0].mxu0
        %v475 = vadd.f32 %v323, %v474
        %476 = vmatprep.mubr.f32.mxu0 0.0
        %477 = vmatmul.mubr.f32.gmra.mrb[0].mxu0 %v281
        %v478 = vpop.f32.mrb[0].mxu0
        %v479 = vadd.f32 %v328, %v478
        %v480 = vpop.f32.mrb[0].mxu0
        %v481 = vadd.f32 %v328, %v480
        %482 = vmatprep.mubr.f32.mxu0 0.0
        %483 = vmatmul.mubr.f32.gmra.mrb[0].mxu0 %v282
        %v484 = vpop.f32.mrb[0].mxu0
        %v485 = vadd.f32 %v333, %v484
        %v486 = vpop.f32.mrb[0].mxu0
        %v487 = vadd.f32 %v333, %v486
        %488 = vmatprep.mubr.f32.mxu0 0.0
        %489 = vmatmul.mubr.f32.gmra.mrb[0].mxu0 %v283
        %v490 = vpop.f32.mrb[0].mxu0
        %v491 = vadd.f32 %v338, %v490
        %v492 = vpop.f32.mrb[0].mxu0
        %v493 = vadd.f32 %v338, %v492
        %494 = vmatprep.mubr.f32.mxu0 0.0
        %495 = vmatmul.mubr.f32.gmra.mrb[0].mxu0 %v284
        %v496 = vpop.f32.mrb[0].mxu0
        %v497 = vadd.f32 %v343, %v496
        %v498 = vpop.f32.mrb[0].mxu0
        %v499 = vadd.f32 %v343, %v498
        %500 = vmatprep.mubr.f32.mxu0 0.0
        %501 = vmatmul.mubr.f32.gmra.mrb[0].mxu0 %v285
        %v502 = vpop.f32.mrb[0].mxu0
        %v503 = vadd.f32 %v348, %v502
        %v504 = vpop.f32.mrb[0].mxu0
        %v505 = vadd.f32 %v348, %v504
        %506 = vmatprep.mubr.f32.mxu0 0.0
        %507 = vmatmul.mubr.f32.gmra.mrb[0].mxu0 %v286
        %v508 = vpop.f32.mrb[0].mxu0
        %v509 = vadd.f32 %v353, %v508
        %v510 = vpop.f32.mrb[0].mxu0
        %v511 = vadd.f32 %v353, %v510
        %512 = vmatprep.mubr.f32.mxu0 0.0
        %513 = vmatmul.mubr.f32.gmra.mrb[0].mxu0 %v287
        %v514 = vpop.f32.mrb[0].mxu0
        %v515 = vadd.f32 %v358, %v514
        %v516 = vpop.f32.mrb[0].mxu0
        %v517 = vadd.f32 %v358, %v516
        %518 = vmatprep.mubr.f32.mxu0 0.0
        %519 = vmatmul.mubr.f32.gmra.mrb[0].mxu0 %v288
        %v520 = vpop.f32.mrb[0].mxu0
        %v521 = vadd.f32 %v363, %v520
        %v522 = vpop.f32.mrb[0].mxu0
        %v523 = vadd.f32 %v363, %v522
        %524 = vmatprep.mubr.f32.mxu0 0.0
        %525 = vmatmul.mubr.f32.gmra.mrb[0].mxu0 %v289
        %v526 = vpop.f32.mrb[0].mxu0
        %v527 = vadd.f32 %v368, %v526
        %v528 = vpop.f32.mrb[0].mxu0
        %v529 = vadd.f32 %v368, %v528
        %530 = vdwg.mxu0
        %v531 = vxor.u32 %v437, 2147483648
        %v532 = vxor.u32 %v439, 2147483648
        %v533 = vxor.u32 %v443, 2147483648
        %v534 = vxor.u32 %v445, 2147483648
        %v535 = vxor.u32 %v449, 2147483648
        %v536 = vxor.u32 %v451, 2147483648
        %v537 = vxor.u32 %v455, 2147483648
        %v538 = vxor.u32 %v457, 2147483648
        %v539 = vxor.u32 %v461, 2147483648
        %v540 = vxor.u32 %v463, 2147483648
        %v541 = vxor.u32 %v467, 2147483648
        %v542 = vxor.u32 %v469, 2147483648
        %v543 = vxor.u32 %v473, 2147483648
        %v544 = vxor.u32 %v475, 2147483648
        %v545 = vxor.u32 %v479, 2147483648
        %v546 = vxor.u32 %v481, 2147483648
        %v547 = vxor.u32 %v485, 2147483648
        %v548 = vxor.u32 %v487, 2147483648
        %v549 = vxor.u32 %v491, 2147483648
        %v550 = vxor.u32 %v493, 2147483648
        %v551 = vxor.u32 %v497, 2147483648
        %v552 = vxor.u32 %v499, 2147483648
        %v553 = vxor.u32 %v503, 2147483648
        %v554 = vxor.u32 %v505, 2147483648
        %v555 = vxor.u32 %v509, 2147483648
        %v556 = vxor.u32 %v511, 2147483648
        %v557 = vxor.u32 %v515, 2147483648
        %v558 = vxor.u32 %v517, 2147483648
        %v559 = vxor.u32 %v521, 2147483648
        %v560 = vxor.u32 %v523, 2147483648
        %v561 = vxor.u32 %v527, 2147483648
        %v562 = vxor.u32 %v529, 2147483648
        %v563 = vmul.f32 %v531, 1.442695
        %v564 = vpow.pop %v563
        %v565 = vmul.f32 %v532, 1.442695
        %v566 = vpow.pop %v565
        %v567 = vmul.f32 %v533, 1.442695
        %v568 = vpow.pop %v567
        %v569 = vmul.f32 %v534, 1.442695
        %v570 = vpow.pop %v569
        %v571 = vmul.f32 %v535, 1.442695
        %v572 = vpow.pop %v571
        %v573 = vmul.f32 %v536, 1.442695
        %v574 = vpow.pop %v573
        %v575 = vmul.f32 %v537, 1.442695
        %v576 = vpow.pop %v575
        %v577 = vmul.f32 %v538, 1.442695
        %v578 = vpow.pop %v577
        %v579 = vmul.f32 %v539, 1.442695
        %v580 = vpow.pop %v579
        %v581 = vmul.f32 %v540, 1.442695
        %v582 = vpow.pop %v581
        %v583 = vmul.f32 %v541, 1.442695
        %v584 = vpow.pop %v583
        %v585 = vmul.f32 %v542, 1.442695
        %v586 = vpow.pop %v585
        %v587 = vmul.f32 %v543, 1.442695
        %v588 = vpow.pop %v587
        %v589 = vmul.f32 %v544, 1.442695
        %v590 = vpow.pop %v589
        %v591 = vmul.f32 %v545, 1.442695
        %v592 = vpow.pop %v591
        %v593 = vmul.f32 %v546, 1.442695
        %v594 = vpow.pop %v593
        %v595 = vmul.f32 %v547, 1.442695
        %v596 = vpow.pop %v595
        %v597 = vmul.f32 %v548, 1.442695
        %v598 = vpow.pop %v597
        %v599 = vmul.f32 %v549, 1.442695
        %v600 = vpow.pop %v599
        %v601 = vmul.f32 %v550, 1.442695
        %v602 = vpow.pop %v601
        %v603 = vmul.f32 %v551, 1.442695
        %v604 = vpow.pop %v603
        %v605 = vmul.f32 %v552, 1.442695
        %v606 = vpow.pop %v605
        %v607 = vmul.f32 %v553, 1.442695
        %v608 = vpow.pop %v607
        %v609 = vmul.f32 %v554, 1.442695
        %v610 = vpow.pop %v609
        %v611 = vmul.f32 %v555, 1.442695
        %v612 = vpow.pop %v611
        %v613 = vmul.f32 %v556, 1.442695
        %v614 = vpow.pop %v613
        %v615 = vmul.f32 %v557, 1.442695
        %v616 = vpow.pop %v615
        %v617 = vmul.f32 %v558, 1.442695
        %v618 = vpow.pop %v617
        %v619 = vmul.f32 %v559, 1.442695
        %v620 = vpow.pop %v619
        %v621 = vmul.f32 %v560, 1.442695
        %v622 = vpow.pop %v621
        %v623 = vmul.f32 %v561, 1.442695
        %v624 = vpow.pop %v623
        %v625 = vmul.f32 %v562, 1.442695
        %v626 = vpow.pop %v625
        %v627 = vadd.f32 %v564, 1.0
        %v628 = vadd.f32 %v566, 1.0
        %v629 = vadd.f32 %v568, 1.0
        %v630 = vadd.f32 %v570, 1.0
        %v631 = vadd.f32 %v572, 1.0
        %v632 = vadd.f32 %v574, 1.0
        %v633 = vadd.f32 %v576, 1.0
        %v634 = vadd.f32 %v578, 1.0
        %v635 = vadd.f32 %v580, 1.0
        %v636 = vadd.f32 %v582, 1.0
        %v637 = vadd.f32 %v584, 1.0
        %v638 = vadd.f32 %v586, 1.0
        %v639 = vadd.f32 %v588, 1.0
        %v640 = vadd.f32 %v590, 1.0
        %v641 = vadd.f32 %v592, 1.0
        %v642 = vadd.f32 %v594, 1.0
        %v643 = vadd.f32 %v596, 1.0
        %v644 = vadd.f32 %v598, 1.0
        %v645 = vadd.f32 %v600, 1.0
        %v646 = vadd.f32 %v602, 1.0
        %v647 = vadd.f32 %v604, 1.0
        %v648 = vadd.f32 %v606, 1.0
        %v649 = vadd.f32 %v608, 1.0
        %v650 = vadd.f32 %v610, 1.0
        %v651 = vadd.f32 %v612, 1.0
        %v652 = vadd.f32 %v614, 1.0
        %v653 = vadd.f32 %v616, 1.0
        %v654 = vadd.f32 %v618, 1.0
        %v655 = vadd.f32 %v620, 1.0
        %v656 = vadd.f32 %v622, 1.0
        %v657 = vadd.f32 %v624, 1.0
        %v658 = vadd.f32 %v626, 1.0
        %v659 = vrcp.pop %v627
        %v660 = vmul.f32 1.0, %v659
        %v661 = vrcp.pop %v628
        %v662 = vmul.f32 1.0, %v661
        %v663 = vrcp.pop %v629
        %v664 = vmul.f32 1.0, %v663
        %v665 = vrcp.pop %v630
        %v666 = vmul.f32 1.0, %v665
        %v667 = vrcp.pop %v631
        %v668 = vmul.f32 1.0, %v667
        %v669 = vrcp.pop %v632
        %v670 = vmul.f32 1.0, %v669
        %v671 = vrcp.pop %v633
        %v672 = vmul.f32 1.0, %v671
        %v673 = vrcp.pop %v634
        %v674 = vmul.f32 1.0, %v673
        %v675 = vrcp.pop %v635
        %v676 = vmul.f32 1.0, %v675
        %v677 = vrcp.pop %v636
        %v678 = vmul.f32 1.0, %v677
        %v679 = vrcp.pop %v637
        %v680 = vmul.f32 1.0, %v679
        %v681 = vrcp.pop %v638
        %v682 = vmul.f32 1.0, %v681
        %v683 = vrcp.pop %v639
        %v684 = vmul.f32 1.0, %v683
        %v685 = vrcp.pop %v640
        %v686 = vmul.f32 1.0, %v685
        %v687 = vrcp.pop %v641
        %v688 = vmul.f32 1.0, %v687
        %v689 = vrcp.pop %v642
        %v690 = vmul.f32 1.0, %v689
        %v691 = vrcp.pop %v643
        %v692 = vmul.f32 1.0, %v691
        %v693 = vrcp.pop %v644
        %v694 = vmul.f32 1.0, %v693
        %v695 = vrcp.pop %v645
        %v696 = vmul.f32 1.0, %v695
        %v697 = vrcp.pop %v646
        %v698 = vmul.f32 1.0, %v697
        %v699 = vrcp.pop %v647
        %v700 = vmul.f32 1.0, %v699
        %v701 = vrcp.pop %v648
        %v702 = vmul.f32 1.0, %v701
        %v703 = vrcp.pop %v649
        %v704 = vmul.f32 1.0, %v703
        %v705 = vrcp.pop %v650
        %v706 = vmul.f32 1.0, %v705
        %v707 = vrcp.pop %v651
        %v708 = vmul.f32 1.0, %v707
        %v709 = vrcp.pop %v652
        %v710 = vmul.f32 1.0, %v709
        %v711 = vrcp.pop %v653
        %v712 = vmul.f32 1.0, %v711
        %v713 = vrcp.pop %v654
        %v714 = vmul.f32 1.0, %v713
        %v715 = vrcp.pop %v655
        %v716 = vmul.f32 1.0, %v715
        %v717 = vrcp.pop %v656
        %v718 = vmul.f32 1.0, %v717
        %v719 = vrcp.pop %v657
        %v720 = vmul.f32 1.0, %v719
        %v721 = vrcp.pop %v658
        %v722 = vmul.f32 1.0, %v721
        %v723 = vmul.f32 %v437, %v660
        %v724 = vmul.f32 %v439, %v662
        %v725 = vmul.f32 %v443, %v664
        %v726 = vmul.f32 %v445, %v666
        %v727 = vmul.f32 %v449, %v668
        %v728 = vmul.f32 %v451, %v670
        %v729 = vmul.f32 %v455, %v672
        %v730 = vmul.f32 %v457, %v674
        %v731 = vmul.f32 %v461, %v676
        %v732 = vmul.f32 %v463, %v678
        %v733 = vmul.f32 %v467, %v680
        %v734 = vmul.f32 %v469, %v682
        %v735 = vmul.f32 %v473, %v684
        %v736 = vmul.f32 %v475, %v686
        %v737 = vmul.f32 %v479, %v688
        %v738 = vmul.f32 %v481, %v690
        %v739 = vmul.f32 %v485, %v692
        %v740 = vmul.f32 %v487, %v694
        %v741 = vmul.f32 %v491, %v696
        %v742 = vmul.f32 %v493, %v698
        %v743 = vmul.f32 %v497, %v700
        %v744 = vmul.f32 %v499, %v702
        %v745 = vmul.f32 %v503, %v704
        %v746 = vmul.f32 %v505, %v706
        %v747 = vmul.f32 %v509, %v708
        %v748 = vmul.f32 %v511, %v710
        %v749 = vmul.f32 %v515, %v712
        %v750 = vmul.f32 %v517, %v714
        %v751 = vmul.f32 %v521, %v716
        %v752 = vmul.f32 %v523, %v718
        %v753 = vmul.f32 %v527, %v720
        %v754 = vmul.f32 %v529, %v722
        %755 = vset.pattern.permute.xlu0 1
        %756 = vperm.xlu0 %755, %v258
        %v757 = vpop.permute.xlu0 %756
        %759 = vset.pattern.permute.xlu0 1
        %760 = vperm.xlu0 %759, %v259
        %v761 = vpop.permute.xlu0 %760
        %763 = vset.pattern.permute.xlu0 1
        %764 = vperm.xlu0 %763, %v260
        %v765 = vpop.permute.xlu0 %764
        %767 = vset.pattern.permute.xlu0 1
        %768 = vperm.xlu0 %767, %v261
        %v769 = vpop.permute.xlu0 %768
        %771 = vset.pattern.permute.xlu0 1
        %772 = vperm.xlu0 %771, %v262
        %v773 = vpop.permute.xlu0 %772
        %775 = vset.pattern.permute.xlu0 1
        %776 = vperm.xlu0 %775, %v263
        %v777 = vpop.permute.xlu0 %776
        %779 = vset.pattern.permute.xlu0 1
        %780 = vperm.xlu0 %779, %v264
        %v781 = vpop.permute.xlu0 %780
        %783 = vset.pattern.permute.xlu0 1
        %784 = vperm.xlu0 %783, %v265
        %v785 = vpop.permute.xlu0 %784
        %787 = vset.pattern.permute.xlu0 1
        %788 = vperm.xlu0 %787, %v266
        %v789 = vpop.permute.xlu0 %788
        %791 = vset.pattern.permute.xlu0 1
        %792 = vperm.xlu0 %791, %v267
        %v793 = vpop.permute.xlu0 %792
        %795 = vset.pattern.permute.xlu0 1
        %796 = vperm.xlu0 %795, %v268
        %v797 = vpop.permute.xlu0 %796
        %799 = vset.pattern.permute.xlu0 1
        %800 = vperm.xlu0 %799, %v269
        %v801 = vpop.permute.xlu0 %800
        %803 = vset.pattern.permute.xlu0 1
        %804 = vperm.xlu0 %803, %v270
        %v805 = vpop.permute.xlu0 %804
        %807 = vset.pattern.permute.xlu0 1
        %808 = vperm.xlu0 %807, %v271
        %v809 = vpop.permute.xlu0 %808
        %811 = vset.pattern.permute.xlu0 1
        %812 = vperm.xlu0 %811, %v272
        %v813 = vpop.permute.xlu0 %812
        %815 = vset.pattern.permute.xlu0 1
        %816 = vperm.xlu0 %815, %v273
        %v817 = vpop.permute.xlu0 %816
        %v819 = vmul.f32 %v723, %v757
        %v820 = vmul.f32 %v724, %v757
        %v821 = vmul.f32 %v725, %v761
        %v822 = vmul.f32 %v726, %v761
        %v823 = vmul.f32 %v727, %v765
        %v824 = vmul.f32 %v728, %v765
        %v825 = vmul.f32 %v729, %v769
        %v826 = vmul.f32 %v730, %v769
        %v827 = vmul.f32 %v731, %v773
        %v828 = vmul.f32 %v732, %v773
        %v829 = vmul.f32 %v733, %v777
        %v830 = vmul.f32 %v734, %v777
        %v831 = vmul.f32 %v735, %v781
        %v832 = vmul.f32 %v736, %v781
        %v833 = vmul.f32 %v737, %v785
        %v834 = vmul.f32 %v738, %v785
        %v835 = vmul.f32 %v739, %v789
        %v836 = vmul.f32 %v740, %v789
        %v837 = vmul.f32 %v741, %v793
        %v838 = vmul.f32 %v742, %v793
        %v839 = vmul.f32 %v743, %v797
        %v840 = vmul.f32 %v744, %v797
        %v841 = vmul.f32 %v745, %v801
        %v842 = vmul.f32 %v746, %v801
        %v843 = vmul.f32 %v747, %v805
        %v844 = vmul.f32 %v748, %v805
        %v845 = vmul.f32 %v749, %v809
        %v846 = vmul.f32 %v750, %v809
        %v847 = vmul.f32 %v751, %v813
        %v848 = vmul.f32 %v752, %v813
        %v849 = vmul.f32 %v753, %v817
        %v850 = vmul.f32 %v754, %v817
        %851 = vset.pattern.permute.xlu0 2
        %852 = vperm.xlu0 %851, %v258
        %v853 = vpop.permute.xlu0 %852
        %855 = vset.pattern.permute.xlu0 2
        %856 = vperm.xlu0 %855, %v259
        %v857 = vpop.permute.xlu0 %856
        %859 = vset.pattern.permute.xlu0 2
        %860 = vperm.xlu0 %859, %v260
        %v861 = vpop.permute.xlu0 %860
        %863 = vset.pattern.permute.xlu0 2
        %864 = vperm.xlu0 %863, %v261
        %v865 = vpop.permute.xlu0 %864
        %867 = vset.pattern.permute.xlu0 2
        %868 = vperm.xlu0 %867, %v262
        %v869 = vpop.permute.xlu0 %868
        %871 = vset.pattern.permute.xlu0 2
        %872 = vperm.xlu0 %871, %v263
        %v873 = vpop.permute.xlu0 %872
        %875 = vset.pattern.permute.xlu0 2
        %876 = vperm.xlu0 %875, %v264
        %v877 = vpop.permute.xlu0 %876
        %879 = vset.pattern.permute.xlu0 2
        %880 = vperm.xlu0 %879, %v265
        %v881 = vpop.permute.xlu0 %880
        %883 = vset.pattern.permute.xlu0 2
        %884 = vperm.xlu0 %883, %v266
        %v885 = vpop.permute.xlu0 %884
        %887 = vset.pattern.permute.xlu0 2
        %888 = vperm.xlu0 %887, %v267
        %v889 = vpop.permute.xlu0 %888
        %891 = vset.pattern.permute.xlu0 2
        %892 = vperm.xlu0 %891, %v268
        %v893 = vpop.permute.xlu0 %892
        %895 = vset.pattern.permute.xlu0 2
        %896 = vperm.xlu0 %895, %v269
        %v897 = vpop.permute.xlu0 %896
        %899 = vset.pattern.permute.xlu0 2
        %900 = vperm.xlu0 %899, %v270
        %v901 = vpop.permute.xlu0 %900
        %903 = vset.pattern.permute.xlu0 2
        %904 = vperm.xlu0 %903, %v271
        %v905 = vpop.permute.xlu0 %904
        %907 = vset.pattern.permute.xlu0 2
        %908 = vperm.xlu0 %907, %v272
        %v909 = vpop.permute.xlu0 %908
        %911 = vset.pattern.permute.xlu0 2
        %912 = vperm.xlu0 %911, %v273
        %v913 = vpop.permute.xlu0 %912
        %v915 = vadd.f32 %v819, %v853
        %v916 = vadd.f32 %v820, %v853
        %v917 = vadd.f32 %v821, %v857
        %v918 = vadd.f32 %v822, %v857
        %v919 = vadd.f32 %v823, %v861
        %v920 = vadd.f32 %v824, %v861
        %v921 = vadd.f32 %v825, %v865
        %v922 = vadd.f32 %v826, %v865
        %v923 = vadd.f32 %v827, %v869
        %v924 = vadd.f32 %v828, %v869
        %v925 = vadd.f32 %v829, %v873
        %v926 = vadd.f32 %v830, %v873
        %v927 = vadd.f32 %v831, %v877
        %v928 = vadd.f32 %v832, %v877
        %v929 = vadd.f32 %v833, %v881
        %v930 = vadd.f32 %v834, %v881
        %v931 = vadd.f32 %v835, %v885
        %v932 = vadd.f32 %v836, %v885
        %v933 = vadd.f32 %v837, %v889
        %v934 = vadd.f32 %v838, %v889
        %v935 = vadd.f32 %v839, %v893
        %v936 = vadd.f32 %v840, %v893
        %v937 = vadd.f32 %v841, %v897
        %v938 = vadd.f32 %v842, %v897
        %v939 = vadd.f32 %v843, %v901
        %v940 = vadd.f32 %v844, %v901
        %v941 = vadd.f32 %v845, %v905
        %v942 = vadd.f32 %v846, %v905
        %v943 = vadd.f32 %v847, %v909
        %v944 = vadd.f32 %v848, %v909
        %v945 = vadd.f32 %v849, %v913
        %v946 = vadd.f32 %v850, %v913
        %v947 = vld [vmem:[%s1 + $0x80] sm:$0xff]
        %v948 = vld [vmem:[%s1 + $0x88] sm:$0xff]
        %v949 = vld [vmem:[%s1 + $0x90] sm:$0xff]
        %v950 = vld [vmem:[%s1 + $0x98] sm:$0xff]
        %v951 = vld [vmem:[%s1 + $0xa0] sm:$0xff]
        %v952 = vld [vmem:[%s1 + $0xa8] sm:$0xff]
        %v953 = vld [vmem:[%s1 + $0xb0] sm:$0xff]
        %v954 = vld [vmem:[%s1 + $0xb8] sm:$0xff]
        %v955 = vld [vmem:[%s1 + $0xc0] sm:$0xff]
        %v956 = vld [vmem:[%s1 + $0xc8] sm:$0xff]
        %v957 = vld [vmem:[%s1 + $0xd0] sm:$0xff]
        %v958 = vld [vmem:[%s1 + $0xd8] sm:$0xff]
        %v959 = vld [vmem:[%s1 + $0xe0] sm:$0xff]
        %v960 = vld [vmem:[%s1 + $0xe8] sm:$0xff]
        %v961 = vld [vmem:[%s1 + $0xf0] sm:$0xff]
        %v962 = vld [vmem:[%s1 + $0xf8] sm:$0xff]
        %963 = vset.pattern.permute.xlu0 3
        %964 = vperm.xlu0 %963, %v258
        %v965 = vpop.permute.xlu0 %964
        %967 = vset.pattern.permute.xlu0 3
        %968 = vperm.xlu0 %967, %v259
        %v969 = vpop.permute.xlu0 %968
        %971 = vset.pattern.permute.xlu0 3
        %972 = vperm.xlu0 %971, %v260
        %v973 = vpop.permute.xlu0 %972
        %975 = vset.pattern.permute.xlu0 3
        %976 = vperm.xlu0 %975, %v261
        %v977 = vpop.permute.xlu0 %976
        %979 = vset.pattern.permute.xlu0 3
        %980 = vperm.xlu0 %979, %v262
        %v981 = vpop.permute.xlu0 %980
        %983 = vset.pattern.permute.xlu0 3
        %984 = vperm.xlu0 %983, %v263
        %v985 = vpop.permute.xlu0 %984
        %987 = vset.pattern.permute.xlu0 3
        %988 = vperm.xlu0 %987, %v264
        %v989 = vpop.permute.xlu0 %988
        %991 = vset.pattern.permute.xlu0 3
        %992 = vperm.xlu0 %991, %v265
        %v993 = vpop.permute.xlu0 %992
        %995 = vset.pattern.permute.xlu0 3
        %996 = vperm.xlu0 %995, %v266
        %v997 = vpop.permute.xlu0 %996
        %999 = vset.pattern.permute.xlu0 3
        %1000 = vperm.xlu0 %999, %v267
        %v1001 = vpop.permute.xlu0 %1000
        %1003 = vset.pattern.permute.xlu0 3
        %1004 = vperm.xlu0 %1003, %v268
        %v1005 = vpop.permute.xlu0 %1004
        %1007 = vset.pattern.permute.xlu0 3
        %1008 = vperm.xlu0 %1007, %v269
        %v1009 = vpop.permute.xlu0 %1008
        %1011 = vset.pattern.permute.xlu0 3
        %1012 = vperm.xlu0 %1011, %v270
        %v1013 = vpop.permute.xlu0 %1012
        %1015 = vset.pattern.permute.xlu0 3
        %1016 = vperm.xlu0 %1015, %v271
        %v1017 = vpop.permute.xlu0 %1016
        %1019 = vset.pattern.permute.xlu0 3
        %1020 = vperm.xlu0 %1019, %v272
        %v1021 = vpop.permute.xlu0 %1020
        %1023 = vset.pattern.permute.xlu0 3
        %1024 = vperm.xlu0 %1023, %v273
        %v1025 = vpop.permute.xlu0 %1024
        %1027 = vmatprep.subr.mxu0 %v916
        %1028 = vmatpush1.msra.mxu0 %v915
        %1029 = vmatprep.subr.mxu0 %v918
        %1030 = vmatpush1.msra.mxu0 %v917
        %1031 = vmatprep.subr.mxu0 %v920
        %1032 = vmatpush1.msra.mxu0 %v919
        %1033 = vmatprep.subr.mxu0 %v922
        %1034 = vmatpush1.msra.mxu0 %v921
        %1035 = vmatprep.subr.mxu0 %v924
        %1036 = vmatpush1.msra.mxu0 %v923
        %1037 = vmatprep.subr.mxu0 %v926
        %1038 = vmatpush1.msra.mxu0 %v925
        %1039 = vmatprep.subr.mxu0 %v928
        %1040 = vmatpush1.msra.mxu0 %v927
        %1041 = vmatprep.subr.mxu0 %v930
        %1042 = vmatpush1.msra.mxu0 %v929
        %1043 = vmatprep.subr.mxu0 %v932
        %1044 = vmatpush1.msra.mxu0 %v931
        %1045 = vmatprep.subr.mxu0 %v934
        %1046 = vmatpush1.msra.mxu0 %v933
        %1047 = vmatprep.subr.mxu0 %v936
        %1048 = vmatpush1.msra.mxu0 %v935
        %1049 = vmatprep.subr.mxu0 %v938
        %1050 = vmatpush1.msra.mxu0 %v937
        %1051 = vmatprep.subr.mxu0 %v940
        %1052 = vmatpush1.msra.mxu0 %v939
        %1053 = vmatprep.subr.mxu0 %v942
        %1054 = vmatpush1.msra.mxu0 %v941
        %1055 = vmatprep.subr.mxu0 %v944
        %1056 = vmatpush1.msra.mxu0 %v943
        %1057 = vmatprep.subr.mxu0 %v946
        %1058 = vmatpush1.msra.mxu0 %v945
        %1059 = vmatprep.subr.mxu0 0.0
        %1060 = vmatpush1.msra.mxu0 0.0
        %1061 = vmatprep.subr.mxu0 0.0
        %1062 = vmatpush1.msra.mxu0 0.0
        %1063 = vmatprep.subr.mxu0 0.0
        %1064 = vmatpush1.msra.mxu0 0.0
        %1065 = vmatprep.subr.mxu0 0.0
        %1066 = vmatpush1.msra.mxu0 0.0
        %1067 = vmatprep.subr.mxu0 0.0
        %1068 = vmatpush1.msra.mxu0 0.0
        %1069 = vmatprep.subr.mxu0 0.0
        %1070 = vmatpush1.msra.mxu0 0.0
        %1071 = vmatprep.subr.mxu0 0.0
        %1072 = vmatpush1.msra.mxu0 0.0
        %1073 = vmatprep.subr.mxu0 0.0
        %1074 = vmatpush1.msra.mxu0 0.0
        %1075 = vmatprep.subr.mxu0 0.0
        %1076 = vmatpush1.msra.mxu0 0.0
        %1077 = vmatprep.subr.mxu0 0.0
        %1078 = vmatpush1.msra.mxu0 0.0
        %1079 = vmatprep.subr.mxu0 0.0
        %1080 = vmatpush1.msra.mxu0 0.0
        %1081 = vmatprep.subr.mxu0 0.0
        %1082 = vmatpush1.msra.mxu0 0.0
        %1083 = vmatprep.subr.mxu0 0.0
        %1084 = vmatpush1.msra.mxu0 0.0
        %1085 = vmatprep.subr.mxu0 0.0
        %1086 = vmatpush1.msra.mxu0 0.0
        %1087 = vmatprep.subr.mxu0 0.0
        %1088 = vmatpush1.msra.mxu0 0.0
        %1089 = vmatprep.subr.mxu0 0.0
        %1090 = vmatpush1.msra.mxu0 0.0
        %1091 = vmatprep.mubr.f32.mxu0 0.0
        %1092 = vmatmul.mubr.f32.gmra.mrb[0].mxu0 %v947
        %v1093 = vpop.f32.mrb[0].mxu0
        %v1094 = vadd.f32 %v965, %v1093
        %v1095 = vpop.f32.mrb[0].mxu0
        %v1096 = vadd.f32 %v965, %v1095
        %1097 = vmatprep.mubr.f32.mxu0 0.0
        %1098 = vmatmul.mubr.f32.gmra.mrb[0].mxu0 %v948
        %v1099 = vpop.f32.mrb[0].mxu0
        %v1100 = vadd.f32 %v969, %v1099
        %v1101 = vpop.f32.mrb[0].mxu0
        %v1102 = vadd.f32 %v969, %v1101
        %1103 = vmatprep.mubr.f32.mxu0 0.0
        %1104 = vmatmul.mubr.f32.gmra.mrb[0].mxu0 %v949
        %v1105 = vpop.f32.mrb[0].mxu0
        %v1106 = vadd.f32 %v973, %v1105
        %v1107 = vpop.f32.mrb[0].mxu0
        %v1108 = vadd.f32 %v973, %v1107
        %1109 = vmatprep.mubr.f32.mxu0 0.0
        %1110 = vmatmul.mubr.f32.gmra.mrb[0].mxu0 %v950
        %v1111 = vpop.f32.mrb[0].mxu0
        %v1112 = vadd.f32 %v977, %v1111
        %v1113 = vpop.f32.mrb[0].mxu0
        %v1114 = vadd.f32 %v977, %v1113
        %1115 = vmatprep.mubr.f32.mxu0 0.0
        %1116 = vmatmul.mubr.f32.gmra.mrb[0].mxu0 %v951
        %v1117 = vpop.f32.mrb[0].mxu0
        %v1118 = vadd.f32 %v981, %v1117
        %v1119 = vpop.f32.mrb[0].mxu0
        %v1120 = vadd.f32 %v981, %v1119
        %1121 = vmatprep.mubr.f32.mxu0 0.0
        %1122 = vmatmul.mubr.f32.gmra.mrb[0].mxu0 %v952
        %v1123 = vpop.f32.mrb[0].mxu0
        %v1124 = vadd.f32 %v985, %v1123
        %v1125 = vpop.f32.mrb[0].mxu0
        %v1126 = vadd.f32 %v985, %v1125
        %1127 = vmatprep.mubr.f32.mxu0 0.0
        %1128 = vmatmul.mubr.f32.gmra.mrb[0].mxu0 %v953
        %v1129 = vpop.f32.mrb[0].mxu0
        %v1130 = vadd.f32 %v989, %v1129
        %v1131 = vpop.f32.mrb[0].mxu0
        %v1132 = vadd.f32 %v989, %v1131
        %1133 = vmatprep.mubr.f32.mxu0 0.0
        %1134 = vmatmul.mubr.f32.gmra.mrb[0].mxu0 %v954
        %v1135 = vpop.f32.mrb[0].mxu0
        %v1136 = vadd.f32 %v993, %v1135
        %v1137 = vpop.f32.mrb[0].mxu0
        %v1138 = vadd.f32 %v993, %v1137
        %1139 = vmatprep.mubr.f32.mxu0 0.0
        %1140 = vmatmul.mubr.f32.gmra.mrb[0].mxu0 %v955
        %v1141 = vpop.f32.mrb[0].mxu0
        %v1142 = vadd.f32 %v997, %v1141
        %v1143 = vpop.f32.mrb[0].mxu0
        %v1144 = vadd.f32 %v997, %v1143
        %1145 = vmatprep.mubr.f32.mxu0 0.0
        %1146 = vmatmul.mubr.f32.gmra.mrb[0].mxu0 %v956
        %v1147 = vpop.f32.mrb[0].mxu0
        %v1148 = vadd.f32 %v1001, %v1147
        %v1149 = vpop.f32.mrb[0].mxu0
        %v1150 = vadd.f32 %v1001, %v1149
        %1151 = vmatprep.mubr.f32.mxu0 0.0
        %1152 = vmatmul.mubr.f32.gmra.mrb[0].mxu0 %v957
        %v1153 = vpop.f32.mrb[0].mxu0
        %v1154 = vadd.f32 %v1005, %v1153
        %v1155 = vpop.f32.mrb[0].mxu0
        %v1156 = vadd.f32 %v1005, %v1155
        %1157 = vmatprep.mubr.f32.mxu0 0.0
        %1158 = vmatmul.mubr.f32.gmra.mrb[0].mxu0 %v958
        %v1159 = vpop.f32.mrb[0].mxu0
        %v1160 = vadd.f32 %v1009, %v1159
        %v1161 = vpop.f32.mrb[0].mxu0
        %v1162 = vadd.f32 %v1009, %v1161
        %1163 = vmatprep.mubr.f32.mxu0 0.0
        %1164 = vmatmul.mubr.f32.gmra.mrb[0].mxu0 %v959
        %v1165 = vpop.f32.mrb[0].mxu0
        %v1166 = vadd.f32 %v1013, %v1165
        %v1167 = vpop.f32.mrb[0].mxu0
        %v1168 = vadd.f32 %v1013, %v1167
        %1169 = vmatprep.mubr.f32.mxu0 0.0
        %1170 = vmatmul.mubr.f32.gmra.mrb[0].mxu0 %v960
        %v1171 = vpop.f32.mrb[0].mxu0
        %v1172 = vadd.f32 %v1017, %v1171
        %v1173 = vpop.f32.mrb[0].mxu0
        %v1174 = vadd.f32 %v1017, %v1173
        %1175 = vmatprep.mubr.f32.mxu0 0.0
        %1176 = vmatmul.mubr.f32.gmra.mrb[0].mxu0 %v961
        %v1177 = vpop.f32.mrb[0].mxu0
        %v1178 = vadd.f32 %v1021, %v1177
        %v1179 = vpop.f32.mrb[0].mxu0
        %v1180 = vadd.f32 %v1021, %v1179
        %1181 = vmatprep.mubr.f32.mxu0 0.0
        %1182 = vmatmul.mubr.f32.gmra.mrb[0].mxu0 %v962
        %v1183 = vpop.f32.mrb[0].mxu0
        %v1184 = vadd.f32 %v1025, %v1183
        %v1185 = vpop.f32.mrb[0].mxu0
        %v1186 = vadd.f32 %v1025, %v1185
        %1187 = vdwg.mxu0
        %v1188 = vxor.u32 %v1094, 2147483648
        %v1189 = vxor.u32 %v1096, 2147483648
        %v1190 = vxor.u32 %v1100, 2147483648
        %v1191 = vxor.u32 %v1102, 2147483648
        %v1192 = vxor.u32 %v1106, 2147483648
        %v1193 = vxor.u32 %v1108, 2147483648
        %v1194 = vxor.u32 %v1112, 2147483648
        %v1195 = vxor.u32 %v1114, 2147483648
        %v1196 = vxor.u32 %v1118, 2147483648
        %v1197 = vxor.u32 %v1120, 2147483648
        %v1198 = vxor.u32 %v1124, 2147483648
        %v1199 = vxor.u32 %v1126, 2147483648
        %v1200 = vxor.u32 %v1130, 2147483648
        %v1201 = vxor.u32 %v1132, 2147483648
        %v1202 = vxor.u32 %v1136, 2147483648
        %v1203 = vxor.u32 %v1138, 2147483648
        %v1204 = vxor.u32 %v1142, 2147483648
        %v1205 = vxor.u32 %v1144, 2147483648
        %v1206 = vxor.u32 %v1148, 2147483648
        %v1207 = vxor.u32 %v1150, 2147483648
        %v1208 = vxor.u32 %v1154, 2147483648
        %v1209 = vxor.u32 %v1156, 2147483648
        %v1210 = vxor.u32 %v1160, 2147483648
        %v1211 = vxor.u32 %v1162, 2147483648
        %v1212 = vxor.u32 %v1166, 2147483648
        %v1213 = vxor.u32 %v1168, 2147483648
        %v1214 = vxor.u32 %v1172, 2147483648
        %v1215 = vxor.u32 %v1174, 2147483648
        %v1216 = vxor.u32 %v1178, 2147483648
        %v1217 = vxor.u32 %v1180, 2147483648
        %v1218 = vxor.u32 %v1184, 2147483648
        %v1219 = vxor.u32 %v1186, 2147483648
        %v1220 = vmul.f32 %v1188, 1.442695
        %v1221 = vpow.pop %v1220
        %v1222 = vmul.f32 %v1189, 1.442695
        %v1223 = vpow.pop %v1222
        %v1224 = vmul.f32 %v1190, 1.442695
        %v1225 = vpow.pop %v1224
        %v1226 = vmul.f32 %v1191, 1.442695
        %v1227 = vpow.pop %v1226
        %v1228 = vmul.f32 %v1192, 1.442695
        %v1229 = vpow.pop %v1228
        %v1230 = vmul.f32 %v1193, 1.442695
        %v1231 = vpow.pop %v1230
        %v1232 = vmul.f32 %v1194, 1.442695
        %v1233 = vpow.pop %v1232
        %v1234 = vmul.f32 %v1195, 1.442695
        %v1235 = vpow.pop %v1234
        %v1236 = vmul.f32 %v1196, 1.442695
        %v1237 = vpow.pop %v1236
        %v1238 = vmul.f32 %v1197, 1.442695
        %v1239 = vpow.pop %v1238
        %v1240 = vmul.f32 %v1198, 1.442695
        %v1241 = vpow.pop %v1240
        %v1242 = vmul.f32 %v1199, 1.442695
        %v1243 = vpow.pop %v1242
        %v1244 = vmul.f32 %v1200, 1.442695
        %v1245 = vpow.pop %v1244
        %v1246 = vmul.f32 %v1201, 1.442695
        %v1247 = vpow.pop %v1246
        %v1248 = vmul.f32 %v1202, 1.442695
        %v1249 = vpow.pop %v1248
        %v1250 = vmul.f32 %v1203, 1.442695
        %v1251 = vpow.pop %v1250
        %v1252 = vmul.f32 %v1204, 1.442695
        %v1253 = vpow.pop %v1252
        %v1254 = vmul.f32 %v1205, 1.442695
        %v1255 = vpow.pop %v1254
        %v1256 = vmul.f32 %v1206, 1.442695
        %v1257 = vpow.pop %v1256
        %v1258 = vmul.f32 %v1207, 1.442695
        %v1259 = vpow.pop %v1258
        %v1260 = vmul.f32 %v1208, 1.442695
        %v1261 = vpow.pop %v1260
        %v1262 = vmul.f32 %v1209, 1.442695
        %v1263 = vpow.pop %v1262
        %v1264 = vmul.f32 %v1210, 1.442695
        %v1265 = vpow.pop %v1264
        %v1266 = vmul.f32 %v1211, 1.442695
        %v1267 = vpow.pop %v1266
        %v1268 = vmul.f32 %v1212, 1.442695
        %v1269 = vpow.pop %v1268
        %v1270 = vmul.f32 %v1213, 1.442695
        %v1271 = vpow.pop %v1270
        %v1272 = vmul.f32 %v1214, 1.442695
        %v1273 = vpow.pop %v1272
        %v1274 = vmul.f32 %v1215, 1.442695
        %v1275 = vpow.pop %v1274
        %v1276 = vmul.f32 %v1216, 1.442695
        %v1277 = vpow.pop %v1276
        %v1278 = vmul.f32 %v1217, 1.442695
        %v1279 = vpow.pop %v1278
        %v1280 = vmul.f32 %v1218, 1.442695
        %v1281 = vpow.pop %v1280
        %v1282 = vmul.f32 %v1219, 1.442695
        %v1283 = vpow.pop %v1282
        %v1284 = vadd.f32 %v1221, 1.0
        %v1285 = vadd.f32 %v1223, 1.0
        %v1286 = vadd.f32 %v1225, 1.0
        %v1287 = vadd.f32 %v1227, 1.0
        %v1288 = vadd.f32 %v1229, 1.0
        %v1289 = vadd.f32 %v1231, 1.0
        %v1290 = vadd.f32 %v1233, 1.0
        %v1291 = vadd.f32 %v1235, 1.0
        %v1292 = vadd.f32 %v1237, 1.0
        %v1293 = vadd.f32 %v1239, 1.0
        %v1294 = vadd.f32 %v1241, 1.0
        %v1295 = vadd.f32 %v1243, 1.0
        %v1296 = vadd.f32 %v1245, 1.0
        %v1297 = vadd.f32 %v1247, 1.0
        %v1298 = vadd.f32 %v1249, 1.0
        %v1299 = vadd.f32 %v1251, 1.0
        %v1300 = vadd.f32 %v1253, 1.0
        %v1301 = vadd.f32 %v1255, 1.0
        %v1302 = vadd.f32 %v1257, 1.0
        %v1303 = vadd.f32 %v1259, 1.0
        %v1304 = vadd.f32 %v1261, 1.0
        %v1305 = vadd.f32 %v1263, 1.0
        %v1306 = vadd.f32 %v1265, 1.0
        %v1307 = vadd.f32 %v1267, 1.0
        %v1308 = vadd.f32 %v1269, 1.0
        %v1309 = vadd.f32 %v1271, 1.0
        %v1310 = vadd.f32 %v1273, 1.0
        %v1311 = vadd.f32 %v1275, 1.0
        %v1312 = vadd.f32 %v1277, 1.0
        %v1313 = vadd.f32 %v1279, 1.0
        %v1314 = vadd.f32 %v1281, 1.0
        %v1315 = vadd.f32 %v1283, 1.0
        %v1316 = vrcp.pop %v1284
        %v1317 = vmul.f32 1.0, %v1316
        %v1318 = vrcp.pop %v1285
        %v1319 = vmul.f32 1.0, %v1318
        %v1320 = vrcp.pop %v1286
        %v1321 = vmul.f32 1.0, %v1320
        %v1322 = vrcp.pop %v1287
        %v1323 = vmul.f32 1.0, %v1322
        %v1324 = vrcp.pop %v1288
        %v1325 = vmul.f32 1.0, %v1324
        %v1326 = vrcp.pop %v1289
        %v1327 = vmul.f32 1.0, %v1326
        %v1328 = vrcp.pop %v1290
        %v1329 = vmul.f32 1.0, %v1328
        %v1330 = vrcp.pop %v1291
        %v1331 = vmul.f32 1.0, %v1330
        %v1332 = vrcp.pop %v1292
        %v1333 = vmul.f32 1.0, %v1332
        %v1334 = vrcp.pop %v1293
        %v1335 = vmul.f32 1.0, %v1334
        %v1336 = vrcp.pop %v1294
        %v1337 = vmul.f32 1.0, %v1336
        %v1338 = vrcp.pop %v1295
        %v1339 = vmul.f32 1.0, %v1338
        %v1340 = vrcp.pop %v1296
        %v1341 = vmul.f32 1.0, %v1340
        %v1342 = vrcp.pop %v1297
        %v1343 = vmul.f32 1.0, %v1342
        %v1344 = vrcp.pop %v1298
        %v1345 = vmul.f32 1.0, %v1344
        %v1346 = vrcp.pop %v1299
        %v1347 = vmul.f32 1.0, %v1346
        %v1348 = vrcp.pop %v1300
        %v1349 = vmul.f32 1.0, %v1348
        %v1350 = vrcp.pop %v1301
        %v1351 = vmul.f32 1.0, %v1350
        %v1352 = vrcp.pop %v1302
        %v1353 = vmul.f32 1.0, %v1352
        %v1354 = vrcp.pop %v1303
        %v1355 = vmul.f32 1.0, %v1354
        %v1356 = vrcp.pop %v1304
        %v1357 = vmul.f32 1.0, %v1356
        %v1358 = vrcp.pop %v1305
        %v1359 = vmul.f32 1.0, %v1358
        %v1360 = vrcp.pop %v1306
        %v1361 = vmul.f32 1.0, %v1360
        %v1362 = vrcp.pop %v1307
        %v1363 = vmul.f32 1.0, %v1362
        %v1364 = vrcp.pop %v1308
        %v1365 = vmul.f32 1.0, %v1364
        %v1366 = vrcp.pop %v1309
        %v1367 = vmul.f32 1.0, %v1366
        %v1368 = vrcp.pop %v1310
        %v1369 = vmul.f32 1.0, %v1368
        %v1370 = vrcp.pop %v1311
        %v1371 = vmul.f32 1.0, %v1370
        %v1372 = vrcp.pop %v1312
        %v1373 = vmul.f32 1.0, %v1372
        %v1374 = vrcp.pop %v1313
        %v1375 = vmul.f32 1.0, %v1374
        %v1376 = vrcp.pop %v1314
        %v1377 = vmul.f32 1.0, %v1376
        %v1378 = vrcp.pop %v1315
        %v1379 = vmul.f32 1.0, %v1378
        %v1380 = vmul.f32 %v1094, %v1317
        %v1381 = vmul.f32 %v1096, %v1319
        %v1382 = vmul.f32 %v1100, %v1321
        %v1383 = vmul.f32 %v1102, %v1323
        %v1384 = vmul.f32 %v1106, %v1325
        %v1385 = vmul.f32 %v1108, %v1327
        %v1386 = vmul.f32 %v1112, %v1329
        %v1387 = vmul.f32 %v1114, %v1331
        %v1388 = vmul.f32 %v1118, %v1333
        %v1389 = vmul.f32 %v1120, %v1335
        %v1390 = vmul.f32 %v1124, %v1337
        %v1391 = vmul.f32 %v1126, %v1339
        %v1392 = vmul.f32 %v1130, %v1341
        %v1393 = vmul.f32 %v1132, %v1343
        %v1394 = vmul.f32 %v1136, %v1345
        %v1395 = vmul.f32 %v1138, %v1347
        %v1396 = vmul.f32 %v1142, %v1349
        %v1397 = vmul.f32 %v1144, %v1351
        %v1398 = vmul.f32 %v1148, %v1353
        %v1399 = vmul.f32 %v1150, %v1355
        %v1400 = vmul.f32 %v1154, %v1357
        %v1401 = vmul.f32 %v1156, %v1359
        %v1402 = vmul.f32 %v1160, %v1361
        %v1403 = vmul.f32 %v1162, %v1363
        %v1404 = vmul.f32 %v1166, %v1365
        %v1405 = vmul.f32 %v1168, %v1367
        %v1406 = vmul.f32 %v1172, %v1369
        %v1407 = vmul.f32 %v1174, %v1371
        %v1408 = vmul.f32 %v1178, %v1373
        %v1409 = vmul.f32 %v1180, %v1375
        %v1410 = vmul.f32 %v1184, %v1377
        %v1411 = vmul.f32 %v1186, %v1379
        %1412 = vset.pattern.permute.xlu0 4
        %1413 = vperm.xlu0 %1412, %v258
        %v1414 = vpop.permute.xlu0 %1413
        %1416 = vset.pattern.permute.xlu0 4
        %1417 = vperm.xlu0 %1416, %v259
        %v1418 = vpop.permute.xlu0 %1417
        %1420 = vset.pattern.permute.xlu0 4
        %1421 = vperm.xlu0 %1420, %v260
        %v1422 = vpop.permute.xlu0 %1421
        %1424 = vset.pattern.permute.xlu0 4
        %1425 = vperm.xlu0 %1424, %v261
        %v1426 = vpop.permute.xlu0 %1425
        %1428 = vset.pattern.permute.xlu0 4
        %1429 = vperm.xlu0 %1428, %v262
        %v1430 = vpop.permute.xlu0 %1429
        %1432 = vset.pattern.permute.xlu0 4
        %1433 = vperm.xlu0 %1432, %v263
        %v1434 = vpop.permute.xlu0 %1433
        %1436 = vset.pattern.permute.xlu0 4
        %1437 = vperm.xlu0 %1436, %v264
        %v1438 = vpop.permute.xlu0 %1437
        %1440 = vset.pattern.permute.xlu0 4
        %1441 = vperm.xlu0 %1440, %v265
        %v1442 = vpop.permute.xlu0 %1441
        %1444 = vset.pattern.permute.xlu0 4
        %1445 = vperm.xlu0 %1444, %v266
        %v1446 = vpop.permute.xlu0 %1445
        %1448 = vset.pattern.permute.xlu0 4
        %1449 = vperm.xlu0 %1448, %v267
        %v1450 = vpop.permute.xlu0 %1449
        %1452 = vset.pattern.permute.xlu0 4
        %1453 = vperm.xlu0 %1452, %v268
        %v1454 = vpop.permute.xlu0 %1453
        %1456 = vset.pattern.permute.xlu0 4
        %1457 = vperm.xlu0 %1456, %v269
        %v1458 = vpop.permute.xlu0 %1457
        %1460 = vset.pattern.permute.xlu0 4
        %1461 = vperm.xlu0 %1460, %v270
        %v1462 = vpop.permute.xlu0 %1461
        %1464 = vset.pattern.permute.xlu0 4
        %1465 = vperm.xlu0 %1464, %v271
        %v1466 = vpop.permute.xlu0 %1465
        %1468 = vset.pattern.permute.xlu0 4
        %1469 = vperm.xlu0 %1468, %v272
        %v1470 = vpop.permute.xlu0 %1469
        %1472 = vset.pattern.permute.xlu0 4
        %1473 = vperm.xlu0 %1472, %v273
        %v1474 = vpop.permute.xlu0 %1473
        %v1476 = vmul.f32 %v1380, %v1414
        %v1477 = vmul.f32 %v1381, %v1414
        %v1478 = vmul.f32 %v1382, %v1418
        %v1479 = vmul.f32 %v1383, %v1418
        %v1480 = vmul.f32 %v1384, %v1422
        %v1481 = vmul.f32 %v1385, %v1422
        %v1482 = vmul.f32 %v1386, %v1426
        %v1483 = vmul.f32 %v1387, %v1426
        %v1484 = vmul.f32 %v1388, %v1430
        %v1485 = vmul.f32 %v1389, %v1430
        %v1486 = vmul.f32 %v1390, %v1434
        %v1487 = vmul.f32 %v1391, %v1434
        %v1488 = vmul.f32 %v1392, %v1438
        %v1489 = vmul.f32 %v1393, %v1438
        %v1490 = vmul.f32 %v1394, %v1442
        %v1491 = vmul.f32 %v1395, %v1442
        %v1492 = vmul.f32 %v1396, %v1446
        %v1493 = vmul.f32 %v1397, %v1446
        %v1494 = vmul.f32 %v1398, %v1450
        %v1495 = vmul.f32 %v1399, %v1450
        %v1496 = vmul.f32 %v1400, %v1454
        %v1497 = vmul.f32 %v1401, %v1454
        %v1498 = vmul.f32 %v1402, %v1458
        %v1499 = vmul.f32 %v1403, %v1458
        %v1500 = vmul.f32 %v1404, %v1462
        %v1501 = vmul.f32 %v1405, %v1462
        %v1502 = vmul.f32 %v1406, %v1466
        %v1503 = vmul.f32 %v1407, %v1466
        %v1504 = vmul.f32 %v1408, %v1470
        %v1505 = vmul.f32 %v1409, %v1470
        %v1506 = vmul.f32 %v1410, %v1474
        %v1507 = vmul.f32 %v1411, %v1474
        %1508 = vset.pattern.permute.xlu0 5
        %1509 = vperm.xlu0 %1508, %v258
        %v1510 = vpop.permute.xlu0 %1509
        %1512 = vset.pattern.permute.xlu0 5
        %1513 = vperm.xlu0 %1512, %v259
        %v1514 = vpop.permute.xlu0 %1513
        %1516 = vset.pattern.permute.xlu0 5
        %1517 = vperm.xlu0 %1516, %v260
        %v1518 = vpop.permute.xlu0 %1517
        %1520 = vset.pattern.permute.xlu0 5
        %1521 = vperm.xlu0 %1520, %v261
        %v1522 = vpop.permute.xlu0 %1521
        %1524 = vset.pattern.permute.xlu0 5
        %1525 = vperm.xlu0 %1524, %v262
        %v1526 = vpop.permute.xlu0 %1525
        %1528 = vset.pattern.permute.xlu0 5
        %1529 = vperm.xlu0 %1528, %v263
        %v1530 = vpop.permute.xlu0 %1529
        %1532 = vset.pattern.permute.xlu0 5
        %1533 = vperm.xlu0 %1532, %v264
        %v1534 = vpop.permute.xlu0 %1533
        %1536 = vset.pattern.permute.xlu0 5
        %1537 = vperm.xlu0 %1536, %v265
        %v1538 = vpop.permute.xlu0 %1537
        %1540 = vset.pattern.permute.xlu0 5
        %1541 = vperm.xlu0 %1540, %v266
        %v1542 = vpop.permute.xlu0 %1541
        %1544 = vset.pattern.permute.xlu0 5
        %1545 = vperm.xlu0 %1544, %v267
        %v1546 = vpop.permute.xlu0 %1545
        %1548 = vset.pattern.permute.xlu0 5
        %1549 = vperm.xlu0 %1548, %v268
        %v1550 = vpop.permute.xlu0 %1549
        %1552 = vset.pattern.permute.xlu0 5
        %1553 = vperm.xlu0 %1552, %v269
        %v1554 = vpop.permute.xlu0 %1553
        %1556 = vset.pattern.permute.xlu0 5
        %1557 = vperm.xlu0 %1556, %v270
        %v1558 = vpop.permute.xlu0 %1557
        %1560 = vset.pattern.permute.xlu0 5
        %1561 = vperm.xlu0 %1560, %v271
        %v1562 = vpop.permute.xlu0 %1561
        %1564 = vset.pattern.permute.xlu0 5
        %1565 = vperm.xlu0 %1564, %v272
        %v1566 = vpop.permute.xlu0 %1565
        %1568 = vset.pattern.permute.xlu0 5
        %1569 = vperm.xlu0 %1568, %v273
        %v1570 = vpop.permute.xlu0 %1569
        %v1572 = vadd.f32 %v1476, %v1510
        %v1573 = vadd.f32 %v1477, %v1510
        %v1574 = vadd.f32 %v1478, %v1514
        %v1575 = vadd.f32 %v1479, %v1514
        %v1576 = vadd.f32 %v1480, %v1518
        %v1577 = vadd.f32 %v1481, %v1518
        %v1578 = vadd.f32 %v1482, %v1522
        %v1579 = vadd.f32 %v1483, %v1522
        %v1580 = vadd.f32 %v1484, %v1526
        %v1581 = vadd.f32 %v1485, %v1526
        %v1582 = vadd.f32 %v1486, %v1530
        %v1583 = vadd.f32 %v1487, %v1530
        %v1584 = vadd.f32 %v1488, %v1534
        %v1585 = vadd.f32 %v1489, %v1534
        %v1586 = vadd.f32 %v1490, %v1538
        %v1587 = vadd.f32 %v1491, %v1538
        %v1588 = vadd.f32 %v1492, %v1542
        %v1589 = vadd.f32 %v1493, %v1542
        %v1590 = vadd.f32 %v1494, %v1546
        %v1591 = vadd.f32 %v1495, %v1546
        %v1592 = vadd.f32 %v1496, %v1550
        %v1593 = vadd.f32 %v1497, %v1550
        %v1594 = vadd.f32 %v1498, %v1554
        %v1595 = vadd.f32 %v1499, %v1554
        %v1596 = vadd.f32 %v1500, %v1558
        %v1597 = vadd.f32 %v1501, %v1558
        %v1598 = vadd.f32 %v1502, %v1562
        %v1599 = vadd.f32 %v1503, %v1562
        %v1600 = vadd.f32 %v1504, %v1566
        %v1601 = vadd.f32 %v1505, %v1566
        %v1602 = vadd.f32 %v1506, %v1570
        %v1603 = vadd.f32 %v1507, %v1570
        %v1604 = vld [vmem:[%s1 + $0x100] sm:$0xff]
        %v1605 = vld [vmem:[%s1 + $0x108] sm:$0xff]
        %v1606 = vld [vmem:[%s1 + $0x110] sm:$0xff]
        %v1607 = vld [vmem:[%s1 + $0x118] sm:$0xff]
        %v1608 = vld [vmem:[%s1 + $0x120] sm:$0xff]
        %v1609 = vld [vmem:[%s1 + $0x128] sm:$0xff]
        %v1610 = vld [vmem:[%s1 + $0x130] sm:$0xff]
        %v1611 = vld [vmem:[%s1 + $0x138] sm:$0xff]
        %v1612 = vld [vmem:[%s1 + $0x140] sm:$0xff]
        %v1613 = vld [vmem:[%s1 + $0x148] sm:$0xff]
        %v1614 = vld [vmem:[%s1 + $0x150] sm:$0xff]
        %v1615 = vld [vmem:[%s1 + $0x158] sm:$0xff]
        %v1616 = vld [vmem:[%s1 + $0x160] sm:$0xff]
        %v1617 = vld [vmem:[%s1 + $0x168] sm:$0xff]
        %v1618 = vld [vmem:[%s1 + $0x170] sm:$0xff]
        %v1619 = vld [vmem:[%s1 + $0x178] sm:$0xff]
        %1620 = vset.pattern.permute.xlu0 6
        %1621 = vperm.xlu0 %1620, %v258
        %v1622 = vpop.permute.xlu0 %1621
        %1624 = vset.pattern.permute.xlu0 6
        %1625 = vperm.xlu0 %1624, %v259
        %v1626 = vpop.permute.xlu0 %1625
        %1628 = vset.pattern.permute.xlu0 6
        %1629 = vperm.xlu0 %1628, %v260
        %v1630 = vpop.permute.xlu0 %1629
        %1632 = vset.pattern.permute.xlu0 6
        %1633 = vperm.xlu0 %1632, %v261
        %v1634 = vpop.permute.xlu0 %1633
        %1636 = vset.pattern.permute.xlu0 6
        %1637 = vperm.xlu0 %1636, %v262
        %v1638 = vpop.permute.xlu0 %1637
        %1640 = vset.pattern.permute.xlu0 6
        %1641 = vperm.xlu0 %1640, %v263
        %v1642 = vpop.permute.xlu0 %1641
        %1644 = vset.pattern.permute.xlu0 6
        %1645 = vperm.xlu0 %1644, %v264
        %v1646 = vpop.permute.xlu0 %1645
        %1648 = vset.pattern.permute.xlu0 6
        %1649 = vperm.xlu0 %1648, %v265
        %v1650 = vpop.permute.xlu0 %1649
        %1652 = vset.pattern.permute.xlu0 6
        %1653 = vperm.xlu0 %1652, %v266
        %v1654 = vpop.permute.xlu0 %1653
        %1656 = vset.pattern.permute.xlu0 6
        %1657 = vperm.xlu0 %1656, %v267
        %v1658 = vpop.permute.xlu0 %1657
        %1660 = vset.pattern.permute.xlu0 6
        %1661 = vperm.xlu0 %1660, %v268
        %v1662 = vpop.permute.xlu0 %1661
        %1664 = vset.pattern.permute.xlu0 6
        %1665 = vperm.xlu0 %1664, %v269
        %v1666 = vpop.permute.xlu0 %1665
        %1668 = vset.pattern.permute.xlu0 6
        %1669 = vperm.xlu0 %1668, %v270
        %v1670 = vpop.permute.xlu0 %1669
        %1672 = vset.pattern.permute.xlu0 6
        %1673 = vperm.xlu0 %1672, %v271
        %v1674 = vpop.permute.xlu0 %1673
        %1676 = vset.pattern.permute.xlu0 6
        %1677 = vperm.xlu0 %1676, %v272
        %v1678 = vpop.permute.xlu0 %1677
        %1680 = vset.pattern.permute.xlu0 6
        %1681 = vperm.xlu0 %1680, %v273
        %v1682 = vpop.permute.xlu0 %1681
        %1684 = vmatprep.subr.mxu0 %v1573
        %1685 = vmatpush1.msra.mxu0 %v1572
        %1686 = vmatprep.subr.mxu0 %v1575
        %1687 = vmatpush1.msra.mxu0 %v1574
        %1688 = vmatprep.subr.mxu0 %v1577
        %1689 = vmatpush1.msra.mxu0 %v1576
        %1690 = vmatprep.subr.mxu0 %v1579
        %1691 = vmatpush1.msra.mxu0 %v1578
        %1692 = vmatprep.subr.mxu0 %v1581
        %1693 = vmatpush1.msra.mxu0 %v1580
        %1694 = vmatprep.subr.mxu0 %v1583
        %1695 = vmatpush1.msra.mxu0 %v1582
        %1696 = vmatprep.subr.mxu0 %v1585
        %1697 = vmatpush1.msra.mxu0 %v1584
        %1698 = vmatprep.subr.mxu0 %v1587
        %1699 = vmatpush1.msra.mxu0 %v1586
        %1700 = vmatprep.subr.mxu0 %v1589
        %1701 = vmatpush1.msra.mxu0 %v1588
        %1702 = vmatprep.subr.mxu0 %v1591
        %1703 = vmatpush1.msra.mxu0 %v1590
        %1704 = vmatprep.subr.mxu0 %v1593
        %1705 = vmatpush1.msra.mxu0 %v1592
        %1706 = vmatprep.subr.mxu0 %v1595
        %1707 = vmatpush1.msra.mxu0 %v1594
        %1708 = vmatprep.subr.mxu0 %v1597
        %1709 = vmatpush1.msra.mxu0 %v1596
        %1710 = vmatprep.subr.mxu0 %v1599
        %1711 = vmatpush1.msra.mxu0 %v1598
        %1712 = vmatprep.subr.mxu0 %v1601
        %1713 = vmatpush1.msra.mxu0 %v1600
        %1714 = vmatprep.subr.mxu0 %v1603
        %1715 = vmatpush1.msra.mxu0 %v1602
        %1716 = vmatprep.subr.mxu0 0.0
        %1717 = vmatpush1.msra.mxu0 0.0
        %1718 = vmatprep.subr.mxu0 0.0
        %1719 = vmatpush1.msra.mxu0 0.0
        %1720 = vmatprep.subr.mxu0 0.0
        %1721 = vmatpush1.msra.mxu0 0.0
        %1722 = vmatprep.subr.mxu0 0.0
        %1723 = vmatpush1.msra.mxu0 0.0
        %1724 = vmatprep.subr.mxu0 0.0
        %1725 = vmatpush1.msra.mxu0 0.0
        %1726 = vmatprep.subr.mxu0 0.0
        %1727 = vmatpush1.msra.mxu0 0.0
        %1728 = vmatprep.subr.mxu0 0.0
        %1729 = vmatpush1.msra.mxu0 0.0
        %1730 = vmatprep.subr.mxu0 0.0
        %1731 = vmatpush1.msra.mxu0 0.0
        %1732 = vmatprep.subr.mxu0 0.0
        %1733 = vmatpush1.msra.mxu0 0.0
        %1734 = vmatprep.subr.mxu0 0.0
        %1735 = vmatpush1.msra.mxu0 0.0
        %1736 = vmatprep.subr.mxu0 0.0
        %1737 = vmatpush1.msra.mxu0 0.0
        %1738 = vmatprep.subr.mxu0 0.0
        %1739 = vmatpush1.msra.mxu0 0.0
        %1740 = vmatprep.subr.mxu0 0.0
        %1741 = vmatpush1.msra.mxu0 0.0
        %1742 = vmatprep.subr.mxu0 0.0
        %1743 = vmatpush1.msra.mxu0 0.0
        %1744 = vmatprep.subr.mxu0 0.0
        %1745 = vmatpush1.msra.mxu0 0.0
        %1746 = vmatprep.subr.mxu0 0.0
        %1747 = vmatpush1.msra.mxu0 0.0
        %1748 = vmatprep.mubr.f32.mxu0 0.0
        %1749 = vmatmul.mubr.f32.gmra.mrb[0].mxu0 %v1604
        %v1750 = vpop.f32.mrb[0].mxu0
        %v1751 = vadd.f32 %v1622, %v1750
        %v1752 = vpop.f32.mrb[0].mxu0
        %v1753 = vadd.f32 %v1622, %v1752
        %1754 = vmatprep.mubr.f32.mxu0 0.0
        %1755 = vmatmul.mubr.f32.gmra.mrb[0].mxu0 %v1605
        %v1756 = vpop.f32.mrb[0].mxu0
        %v1757 = vadd.f32 %v1626, %v1756
        %v1758 = vpop.f32.mrb[0].mxu0
        %v1759 = vadd.f32 %v1626, %v1758
        %1760 = vmatprep.mubr.f32.mxu0 0.0
        %1761 = vmatmul.mubr.f32.gmra.mrb[0].mxu0 %v1606
        %v1762 = vpop.f32.mrb[0].mxu0
        %v1763 = vadd.f32 %v1630, %v1762
        %v1764 = vpop.f32.mrb[0].mxu0
        %v1765 = vadd.f32 %v1630, %v1764
        %1766 = vmatprep.mubr.f32.mxu0 0.0
        %1767 = vmatmul.mubr.f32.gmra.mrb[0].mxu0 %v1607
        %v1768 = vpop.f32.mrb[0].mxu0
        %v1769 = vadd.f32 %v1634, %v1768
        %v1770 = vpop.f32.mrb[0].mxu0
        %v1771 = vadd.f32 %v1634, %v1770
        %1772 = vmatprep.mubr.f32.mxu0 0.0
        %1773 = vmatmul.mubr.f32.gmra.mrb[0].mxu0 %v1608
        %v1774 = vpop.f32.mrb[0].mxu0
        %v1775 = vadd.f32 %v1638, %v1774
        %v1776 = vpop.f32.mrb[0].mxu0
        %v1777 = vadd.f32 %v1638, %v1776
        %1778 = vmatprep.mubr.f32.mxu0 0.0
        %1779 = vmatmul.mubr.f32.gmra.mrb[0].mxu0 %v1609
        %v1780 = vpop.f32.mrb[0].mxu0
        %v1781 = vadd.f32 %v1642, %v1780
        %v1782 = vpop.f32.mrb[0].mxu0
        %v1783 = vadd.f32 %v1642, %v1782
        %1784 = vmatprep.mubr.f32.mxu0 0.0
        %1785 = vmatmul.mubr.f32.gmra.mrb[0].mxu0 %v1610
        %v1786 = vpop.f32.mrb[0].mxu0
        %v1787 = vadd.f32 %v1646, %v1786
        %v1788 = vpop.f32.mrb[0].mxu0
        %v1789 = vadd.f32 %v1646, %v1788
        %1790 = vmatprep.mubr.f32.mxu0 0.0
        %1791 = vmatmul.mubr.f32.gmra.mrb[0].mxu0 %v1611
        %v1792 = vpop.f32.mrb[0].mxu0
        %v1793 = vadd.f32 %v1650, %v1792
        %v1794 = vpop.f32.mrb[0].mxu0
        %v1795 = vadd.f32 %v1650, %v1794
        %1796 = vmatprep.mubr.f32.mxu0 0.0
        %1797 = vmatmul.mubr.f32.gmra.mrb[0].mxu0 %v1612
        %v1798 = vpop.f32.mrb[0].mxu0
        %v1799 = vadd.f32 %v1654, %v1798
        %v1800 = vpop.f32.mrb[0].mxu0
        %v1801 = vadd.f32 %v1654, %v1800
        %1802 = vmatprep.mubr.f32.mxu0 0.0
        %1803 = vmatmul.mubr.f32.gmra.mrb[0].mxu0 %v1613
        %v1804 = vpop.f32.mrb[0].mxu0
        %v1805 = vadd.f32 %v1658, %v1804
        %v1806 = vpop.f32.mrb[0].mxu0
        %v1807 = vadd.f32 %v1658, %v1806
        %1808 = vmatprep.mubr.f32.mxu0 0.0
        %1809 = vmatmul.mubr.f32.gmra.mrb[0].mxu0 %v1614
        %v1810 = vpop.f32.mrb[0].mxu0
        %v1811 = vadd.f32 %v1662, %v1810
        %v1812 = vpop.f32.mrb[0].mxu0
        %v1813 = vadd.f32 %v1662, %v1812
        %1814 = vmatprep.mubr.f32.mxu0 0.0
        %1815 = vmatmul.mubr.f32.gmra.mrb[0].mxu0 %v1615
        %v1816 = vpop.f32.mrb[0].mxu0
        %v1817 = vadd.f32 %v1666, %v1816
        %v1818 = vpop.f32.mrb[0].mxu0
        %v1819 = vadd.f32 %v1666, %v1818
        %1820 = vmatprep.mubr.f32.mxu0 0.0
        %1821 = vmatmul.mubr.f32.gmra.mrb[0].mxu0 %v1616
        %v1822 = vpop.f32.mrb[0].mxu0
        %v1823 = vadd.f32 %v1670, %v1822
        %v1824 = vpop.f32.mrb[0].mxu0
        %v1825 = vadd.f32 %v1670, %v1824
        %1826 = vmatprep.mubr.f32.mxu0 0.0
        %1827 = vmatmul.mubr.f32.gmra.mrb[0].mxu0 %v1617
        %v1828 = vpop.f32.mrb[0].mxu0
        %v1829 = vadd.f32 %v1674, %v1828
        %v1830 = vpop.f32.mrb[0].mxu0
        %v1831 = vadd.f32 %v1674, %v1830
        %1832 = vmatprep.mubr.f32.mxu0 0.0
        %1833 = vmatmul.mubr.f32.gmra.mrb[0].mxu0 %v1618
        %v1834 = vpop.f32.mrb[0].mxu0
        %v1835 = vadd.f32 %v1678, %v1834
        %v1836 = vpop.f32.mrb[0].mxu0
        %v1837 = vadd.f32 %v1678, %v1836
        %1838 = vmatprep.mubr.f32.mxu0 0.0
        %1839 = vmatmul.mubr.f32.gmra.mrb[0].mxu0 %v1619
        %v1840 = vpop.f32.mrb[0].mxu0
        %v1841 = vadd.f32 %v1682, %v1840
        %v1842 = vpop.f32.mrb[0].mxu0
        %v1843 = vadd.f32 %v1682, %v1842
        %1844 = vdwg.mxu0
        %v1845 = vxor.u32 %v1751, 2147483648
        %v1846 = vxor.u32 %v1753, 2147483648
        %v1847 = vxor.u32 %v1757, 2147483648
        %v1848 = vxor.u32 %v1759, 2147483648
        %v1849 = vxor.u32 %v1763, 2147483648
        %v1850 = vxor.u32 %v1765, 2147483648
        %v1851 = vxor.u32 %v1769, 2147483648
        %v1852 = vxor.u32 %v1771, 2147483648
        %v1853 = vxor.u32 %v1775, 2147483648
        %v1854 = vxor.u32 %v1777, 2147483648
        %v1855 = vxor.u32 %v1781, 2147483648
        %v1856 = vxor.u32 %v1783, 2147483648
        %v1857 = vxor.u32 %v1787, 2147483648
        %v1858 = vxor.u32 %v1789, 2147483648
        %v1859 = vxor.u32 %v1793, 2147483648
        %v1860 = vxor.u32 %v1795, 2147483648
        %v1861 = vxor.u32 %v1799, 2147483648
        %v1862 = vxor.u32 %v1801, 2147483648
        %v1863 = vxor.u32 %v1805, 2147483648
        %v1864 = vxor.u32 %v1807, 2147483648
        %v1865 = vxor.u32 %v1811, 2147483648
        %v1866 = vxor.u32 %v1813, 2147483648
        %v1867 = vxor.u32 %v1817, 2147483648
        %v1868 = vxor.u32 %v1819, 2147483648
        %v1869 = vxor.u32 %v1823, 2147483648
        %v1870 = vxor.u32 %v1825, 2147483648
        %v1871 = vxor.u32 %v1829, 2147483648
        %v1872 = vxor.u32 %v1831, 2147483648
        %v1873 = vxor.u32 %v1835, 2147483648
        %v1874 = vxor.u32 %v1837, 2147483648
        %v1875 = vxor.u32 %v1841, 2147483648
        %v1876 = vxor.u32 %v1843, 2147483648
        %v1877 = vmul.f32 %v1845, 1.442695
        %v1878 = vpow.pop %v1877
        %v1879 = vmul.f32 %v1846, 1.442695
        %v1880 = vpow.pop %v1879
        %v1881 = vmul.f32 %v1847, 1.442695
        %v1882 = vpow.pop %v1881
        %v1883 = vmul.f32 %v1848, 1.442695
        %v1884 = vpow.pop %v1883
        %v1885 = vmul.f32 %v1849, 1.442695
        %v1886 = vpow.pop %v1885
        %v1887 = vmul.f32 %v1850, 1.442695
        %v1888 = vpow.pop %v1887
        %v1889 = vmul.f32 %v1851, 1.442695
        %v1890 = vpow.pop %v1889
        %v1891 = vmul.f32 %v1852, 1.442695
        %v1892 = vpow.pop %v1891
        %v1893 = vmul.f32 %v1853, 1.442695
        %v1894 = vpow.pop %v1893
        %v1895 = vmul.f32 %v1854, 1.442695
        %v1896 = vpow.pop %v1895
        %v1897 = vmul.f32 %v1855, 1.442695
        %v1898 = vpow.pop %v1897
        %v1899 = vmul.f32 %v1856, 1.442695
        %v1900 = vpow.pop %v1899
        %v1901 = vmul.f32 %v1857, 1.442695
        %v1902 = vpow.pop %v1901
        %v1903 = vmul.f32 %v1858, 1.442695
        %v1904 = vpow.pop %v1903
        %v1905 = vmul.f32 %v1859, 1.442695
        %v1906 = vpow.pop %v1905
        %v1907 = vmul.f32 %v1860, 1.442695
        %v1908 = vpow.pop %v1907
        %v1909 = vmul.f32 %v1861, 1.442695
        %v1910 = vpow.pop %v1909
        %v1911 = vmul.f32 %v1862, 1.442695
        %v1912 = vpow.pop %v1911
        %v1913 = vmul.f32 %v1863, 1.442695
        %v1914 = vpow.pop %v1913
        %v1915 = vmul.f32 %v1864, 1.442695
        %v1916 = vpow.pop %v1915
        %v1917 = vmul.f32 %v1865, 1.442695
        %v1918 = vpow.pop %v1917
        %v1919 = vmul.f32 %v1866, 1.442695
        %v1920 = vpow.pop %v1919
        %v1921 = vmul.f32 %v1867, 1.442695
        %v1922 = vpow.pop %v1921
        %v1923 = vmul.f32 %v1868, 1.442695
        %v1924 = vpow.pop %v1923
        %v1925 = vmul.f32 %v1869, 1.442695
        %v1926 = vpow.pop %v1925
        %v1927 = vmul.f32 %v1870, 1.442695
        %v1928 = vpow.pop %v1927
        %v1929 = vmul.f32 %v1871, 1.442695
        %v1930 = vpow.pop %v1929
        %v1931 = vmul.f32 %v1872, 1.442695
        %v1932 = vpow.pop %v1931
        %v1933 = vmul.f32 %v1873, 1.442695
        %v1934 = vpow.pop %v1933
        %v1935 = vmul.f32 %v1874, 1.442695
        %v1936 = vpow.pop %v1935
        %v1937 = vmul.f32 %v1875, 1.442695
        %v1938 = vpow.pop %v1937
        %v1939 = vmul.f32 %v1876, 1.442695
        %v1940 = vpow.pop %v1939
        %v1941 = vadd.f32 %v1878, 1.0
        %v1942 = vadd.f32 %v1880, 1.0
        %v1943 = vadd.f32 %v1882, 1.0
        %v1944 = vadd.f32 %v1884, 1.0
        %v1945 = vadd.f32 %v1886, 1.0
        %v1946 = vadd.f32 %v1888, 1.0
        %v1947 = vadd.f32 %v1890, 1.0
        %v1948 = vadd.f32 %v1892, 1.0
        %v1949 = vadd.f32 %v1894, 1.0
        %v1950 = vadd.f32 %v1896, 1.0
        %v1951 = vadd.f32 %v1898, 1.0
        %v1952 = vadd.f32 %v1900, 1.0
        %v1953 = vadd.f32 %v1902, 1.0
        %v1954 = vadd.f32 %v1904, 1.0
        %v1955 = vadd.f32 %v1906, 1.0
        %v1956 = vadd.f32 %v1908, 1.0
        %v1957 = vadd.f32 %v1910, 1.0
        %v1958 = vadd.f32 %v1912, 1.0
        %v1959 = vadd.f32 %v1914, 1.0
        %v1960 = vadd.f32 %v1916, 1.0
        %v1961 = vadd.f32 %v1918, 1.0
        %v1962 = vadd.f32 %v1920, 1.0
        %v1963 = vadd.f32 %v1922, 1.0
        %v1964 = vadd.f32 %v1924, 1.0
        %v1965 = vadd.f32 %v1926, 1.0
        %v1966 = vadd.f32 %v1928, 1.0
        %v1967 = vadd.f32 %v1930, 1.0
        %v1968 = vadd.f32 %v1932, 1.0
        %v1969 = vadd.f32 %v1934, 1.0
        %v1970 = vadd.f32 %v1936, 1.0
        %v1971 = vadd.f32 %v1938, 1.0
        %v1972 = vadd.f32 %v1940, 1.0
        %v1973 = vrcp.pop %v1941
        %v1974 = vmul.f32 1.0, %v1973
        %v1975 = vrcp.pop %v1942
        %v1976 = vmul.f32 1.0, %v1975
        %v1977 = vrcp.pop %v1943
        %v1978 = vmul.f32 1.0, %v1977
        %v1979 = vrcp.pop %v1944
        %v1980 = vmul.f32 1.0, %v1979
        %v1981 = vrcp.pop %v1945
        %v1982 = vmul.f32 1.0, %v1981
        %v1983 = vrcp.pop %v1946
        %v1984 = vmul.f32 1.0, %v1983
        %v1985 = vrcp.pop %v1947
        %v1986 = vmul.f32 1.0, %v1985
        %v1987 = vrcp.pop %v1948
        %v1988 = vmul.f32 1.0, %v1987
        %v1989 = vrcp.pop %v1949
        %v1990 = vmul.f32 1.0, %v1989
        %v1991 = vrcp.pop %v1950
        %v1992 = vmul.f32 1.0, %v1991
        %v1993 = vrcp.pop %v1951
        %v1994 = vmul.f32 1.0, %v1993
        %v1995 = vrcp.pop %v1952
        %v1996 = vmul.f32 1.0, %v1995
        %v1997 = vrcp.pop %v1953
        %v1998 = vmul.f32 1.0, %v1997
        %v1999 = vrcp.pop %v1954
        %v2000 = vmul.f32 1.0, %v1999
        %v2001 = vrcp.pop %v1955
        %v2002 = vmul.f32 1.0, %v2001
        %v2003 = vrcp.pop %v1956
        %v2004 = vmul.f32 1.0, %v2003
        %v2005 = vrcp.pop %v1957
        %v2006 = vmul.f32 1.0, %v2005
        %v2007 = vrcp.pop %v1958
        %v2008 = vmul.f32 1.0, %v2007
        %v2009 = vrcp.pop %v1959
        %v2010 = vmul.f32 1.0, %v2009
        %v2011 = vrcp.pop %v1960
        %v2012 = vmul.f32 1.0, %v2011
        %v2013 = vrcp.pop %v1961
        %v2014 = vmul.f32 1.0, %v2013
        %v2015 = vrcp.pop %v1962
        %v2016 = vmul.f32 1.0, %v2015
        %v2017 = vrcp.pop %v1963
        %v2018 = vmul.f32 1.0, %v2017
        %v2019 = vrcp.pop %v1964
        %v2020 = vmul.f32 1.0, %v2019
        %v2021 = vrcp.pop %v1965
        %v2022 = vmul.f32 1.0, %v2021
        %v2023 = vrcp.pop %v1966
        %v2024 = vmul.f32 1.0, %v2023
        %v2025 = vrcp.pop %v1967
        %v2026 = vmul.f32 1.0, %v2025
        %v2027 = vrcp.pop %v1968
        %v2028 = vmul.f32 1.0, %v2027
        %v2029 = vrcp.pop %v1969
        %v2030 = vmul.f32 1.0, %v2029
        %v2031 = vrcp.pop %v1970
        %v2032 = vmul.f32 1.0, %v2031
        %v2033 = vrcp.pop %v1971
        %v2034 = vmul.f32 1.0, %v2033
        %v2035 = vrcp.pop %v1972
        %v2036 = vmul.f32 1.0, %v2035
        %v2037 = vmul.f32 %v1751, %v1974
        %v2038 = vmul.f32 %v1753, %v1976
        %v2039 = vmul.f32 %v1757, %v1978
        %v2040 = vmul.f32 %v1759, %v1980
        %v2041 = vmul.f32 %v1763, %v1982
        %v2042 = vmul.f32 %v1765, %v1984
        %v2043 = vmul.f32 %v1769, %v1986
        %v2044 = vmul.f32 %v1771, %v1988
        %v2045 = vmul.f32 %v1775, %v1990
        %v2046 = vmul.f32 %v1777, %v1992
        %v2047 = vmul.f32 %v1781, %v1994
        %v2048 = vmul.f32 %v1783, %v1996
        %v2049 = vmul.f32 %v1787, %v1998
        %v2050 = vmul.f32 %v1789, %v2000
        %v2051 = vmul.f32 %v1793, %v2002
        %v2052 = vmul.f32 %v1795, %v2004
        %v2053 = vmul.f32 %v1799, %v2006
        %v2054 = vmul.f32 %v1801, %v2008
        %v2055 = vmul.f32 %v1805, %v2010
        %v2056 = vmul.f32 %v1807, %v2012
        %v2057 = vmul.f32 %v1811, %v2014
        %v2058 = vmul.f32 %v1813, %v2016
        %v2059 = vmul.f32 %v1817, %v2018
        %v2060 = vmul.f32 %v1819, %v2020
        %v2061 = vmul.f32 %v1823, %v2022
        %v2062 = vmul.f32 %v1825, %v2024
        %v2063 = vmul.f32 %v1829, %v2026
        %v2064 = vmul.f32 %v1831, %v2028
        %v2065 = vmul.f32 %v1835, %v2030
        %v2066 = vmul.f32 %v1837, %v2032
        %v2067 = vmul.f32 %v1841, %v2034
        %v2068 = vmul.f32 %v1843, %v2036
        %2069 = vset.pattern.permute.xlu0 7
        %2070 = vperm.xlu0 %2069, %v258
        %v2071 = vpop.permute.xlu0 %2070
        %2073 = vset.pattern.permute.xlu0 7
        %2074 = vperm.xlu0 %2073, %v259
        %v2075 = vpop.permute.xlu0 %2074
        %2077 = vset.pattern.permute.xlu0 7
        %2078 = vperm.xlu0 %2077, %v260
        %v2079 = vpop.permute.xlu0 %2078
        %2081 = vset.pattern.permute.xlu0 7
        %2082 = vperm.xlu0 %2081, %v261
        %v2083 = vpop.permute.xlu0 %2082
        %2085 = vset.pattern.permute.xlu0 7
        %2086 = vperm.xlu0 %2085, %v262
        %v2087 = vpop.permute.xlu0 %2086
        %2089 = vset.pattern.permute.xlu0 7
        %2090 = vperm.xlu0 %2089, %v263
        %v2091 = vpop.permute.xlu0 %2090
        %2093 = vset.pattern.permute.xlu0 7
        %2094 = vperm.xlu0 %2093, %v264
        %v2095 = vpop.permute.xlu0 %2094
        %2097 = vset.pattern.permute.xlu0 7
        %2098 = vperm.xlu0 %2097, %v265
        %v2099 = vpop.permute.xlu0 %2098
        %2101 = vset.pattern.permute.xlu0 7
        %2102 = vperm.xlu0 %2101, %v266
        %v2103 = vpop.permute.xlu0 %2102
        %2105 = vset.pattern.permute.xlu0 7
        %2106 = vperm.xlu0 %2105, %v267
        %v2107 = vpop.permute.xlu0 %2106
        %2109 = vset.pattern.permute.xlu0 7
        %2110 = vperm.xlu0 %2109, %v268
        %v2111 = vpop.permute.xlu0 %2110
        %2113 = vset.pattern.permute.xlu0 7
        %2114 = vperm.xlu0 %2113, %v269
        %v2115 = vpop.permute.xlu0 %2114
        %2117 = vset.pattern.permute.xlu0 7
        %2118 = vperm.xlu0 %2117, %v270
        %v2119 = vpop.permute.xlu0 %2118
        %2121 = vset.pattern.permute.xlu0 7
        %2122 = vperm.xlu0 %2121, %v271
        %v2123 = vpop.permute.xlu0 %2122
        %2125 = vset.pattern.permute.xlu0 7
        %2126 = vperm.xlu0 %2125, %v272
        %v2127 = vpop.permute.xlu0 %2126
        %2129 = vset.pattern.permute.xlu0 7
        %2130 = vperm.xlu0 %2129, %v273
        %v2131 = vpop.permute.xlu0 %2130
        %v2133 = vmul.f32 %v2037, %v2071
        %v2134 = vmul.f32 %v2038, %v2071
        %v2135 = vmul.f32 %v2039, %v2075
        %v2136 = vmul.f32 %v2040, %v2075
        %v2137 = vmul.f32 %v2041, %v2079
        %v2138 = vmul.f32 %v2042, %v2079
        %v2139 = vmul.f32 %v2043, %v2083
        %v2140 = vmul.f32 %v2044, %v2083
        %v2141 = vmul.f32 %v2045, %v2087
        %v2142 = vmul.f32 %v2046, %v2087
        %v2143 = vmul.f32 %v2047, %v2091
        %v2144 = vmul.f32 %v2048, %v2091
        %v2145 = vmul.f32 %v2049, %v2095
        %v2146 = vmul.f32 %v2050, %v2095
        %v2147 = vmul.f32 %v2051, %v2099
        %v2148 = vmul.f32 %v2052, %v2099
        %v2149 = vmul.f32 %v2053, %v2103
        %v2150 = vmul.f32 %v2054, %v2103
        %v2151 = vmul.f32 %v2055, %v2107
        %v2152 = vmul.f32 %v2056, %v2107
        %v2153 = vmul.f32 %v2057, %v2111
        %v2154 = vmul.f32 %v2058, %v2111
        %v2155 = vmul.f32 %v2059, %v2115
        %v2156 = vmul.f32 %v2060, %v2115
        %v2157 = vmul.f32 %v2061, %v2119
        %v2158 = vmul.f32 %v2062, %v2119
        %v2159 = vmul.f32 %v2063, %v2123
        %v2160 = vmul.f32 %v2064, %v2123
        %v2161 = vmul.f32 %v2065, %v2127
        %v2162 = vmul.f32 %v2066, %v2127
        %v2163 = vmul.f32 %v2067, %v2131
        %v2164 = vmul.f32 %v2068, %v2131
        %2165 = vset.pattern.permute.xlu0 8
        %2166 = vperm.xlu0 %2165, %v258
        %v2167 = vpop.permute.xlu0 %2166
        %2169 = vset.pattern.permute.xlu0 8
        %2170 = vperm.xlu0 %2169, %v259
        %v2171 = vpop.permute.xlu0 %2170
        %2173 = vset.pattern.permute.xlu0 8
        %2174 = vperm.xlu0 %2173, %v260
        %v2175 = vpop.permute.xlu0 %2174
        %2177 = vset.pattern.permute.xlu0 8
        %2178 = vperm.xlu0 %2177, %v261
        %v2179 = vpop.permute.xlu0 %2178
        %2181 = vset.pattern.permute.xlu0 8
        %2182 = vperm.xlu0 %2181, %v262
        %v2183 = vpop.permute.xlu0 %2182
        %2185 = vset.pattern.permute.xlu0 8
        %2186 = vperm.xlu0 %2185, %v263
        %v2187 = vpop.permute.xlu0 %2186
        %2189 = vset.pattern.permute.xlu0 8
        %2190 = vperm.xlu0 %2189, %v264
        %v2191 = vpop.permute.xlu0 %2190
        %2193 = vset.pattern.permute.xlu0 8
        %2194 = vperm.xlu0 %2193, %v265
        %v2195 = vpop.permute.xlu0 %2194
        %2197 = vset.pattern.permute.xlu0 8
        %2198 = vperm.xlu0 %2197, %v266
        %v2199 = vpop.permute.xlu0 %2198
        %2201 = vset.pattern.permute.xlu0 8
        %2202 = vperm.xlu0 %2201, %v267
        %v2203 = vpop.permute.xlu0 %2202
        %2205 = vset.pattern.permute.xlu0 8
        %2206 = vperm.xlu0 %2205, %v268
        %v2207 = vpop.permute.xlu0 %2206
        %2209 = vset.pattern.permute.xlu0 8
        %2210 = vperm.xlu0 %2209, %v269
        %v2211 = vpop.permute.xlu0 %2210
        %2213 = vset.pattern.permute.xlu0 8
        %2214 = vperm.xlu0 %2213, %v270
        %v2215 = vpop.permute.xlu0 %2214
        %2217 = vset.pattern.permute.xlu0 8
        %2218 = vperm.xlu0 %2217, %v271
        %v2219 = vpop.permute.xlu0 %2218
        %2221 = vset.pattern.permute.xlu0 8
        %2222 = vperm.xlu0 %2221, %v272
        %v2223 = vpop.permute.xlu0 %2222
        %2225 = vset.pattern.permute.xlu0 8
        %2226 = vperm.xlu0 %2225, %v273
        %v2227 = vpop.permute.xlu0 %2226
        %v2229 = vadd.f32 %v2133, %v2167
        %v2230 = vadd.f32 %v2134, %v2167
        %v2231 = vadd.f32 %v2135, %v2171
        %v2232 = vadd.f32 %v2136, %v2171
        %v2233 = vadd.f32 %v2137, %v2175
        %v2234 = vadd.f32 %v2138, %v2175
        %v2235 = vadd.f32 %v2139, %v2179
        %v2236 = vadd.f32 %v2140, %v2179
        %v2237 = vadd.f32 %v2141, %v2183
        %v2238 = vadd.f32 %v2142, %v2183
        %v2239 = vadd.f32 %v2143, %v2187
        %v2240 = vadd.f32 %v2144, %v2187
        %v2241 = vadd.f32 %v2145, %v2191
        %v2242 = vadd.f32 %v2146, %v2191
        %v2243 = vadd.f32 %v2147, %v2195
        %v2244 = vadd.f32 %v2148, %v2195
        %v2245 = vadd.f32 %v2149, %v2199
        %v2246 = vadd.f32 %v2150, %v2199
        %v2247 = vadd.f32 %v2151, %v2203
        %v2248 = vadd.f32 %v2152, %v2203
        %v2249 = vadd.f32 %v2153, %v2207
        %v2250 = vadd.f32 %v2154, %v2207
        %v2251 = vadd.f32 %v2155, %v2211
        %v2252 = vadd.f32 %v2156, %v2211
        %v2253 = vadd.f32 %v2157, %v2215
        %v2254 = vadd.f32 %v2158, %v2215
        %v2255 = vadd.f32 %v2159, %v2219
        %v2256 = vadd.f32 %v2160, %v2219
        %v2257 = vadd.f32 %v2161, %v2223
        %v2258 = vadd.f32 %v2162, %v2223
        %v2259 = vadd.f32 %v2163, %v2227
        %v2260 = vadd.f32 %v2164, %v2227
        %v2261 = vld [vmem:[%s1 + $0x180] sm:$0xff]
        %2262 = vset.pattern.permute.xlu0 9
        %2263 = vperm.xlu0 %2262, %v258
        %v2264 = vpop.permute.xlu0 %2263
        %2266 = vmatprep.subr.mxu0 %v2230
        %2267 = vmatpush1.msra.mxu0 %v2229
        %2268 = vmatprep.subr.mxu0 %v2232
        %2269 = vmatpush1.msra.mxu0 %v2231
        %2270 = vmatprep.subr.mxu0 %v2234
        %2271 = vmatpush1.msra.mxu0 %v2233
        %2272 = vmatprep.subr.mxu0 %v2236
        %2273 = vmatpush1.msra.mxu0 %v2235
        %2274 = vmatprep.subr.mxu0 %v2238
        %2275 = vmatpush1.msra.mxu0 %v2237
        %2276 = vmatprep.subr.mxu0 %v2240
        %2277 = vmatpush1.msra.mxu0 %v2239
        %2278 = vmatprep.subr.mxu0 %v2242
        %2279 = vmatpush1.msra.mxu0 %v2241
        %2280 = vmatprep.subr.mxu0 %v2244
        %2281 = vmatpush1.msra.mxu0 %v2243
        %2282 = vmatprep.subr.mxu0 %v2246
        %2283 = vmatpush1.msra.mxu0 %v2245
        %2284 = vmatprep.subr.mxu0 %v2248
        %2285 = vmatpush1.msra.mxu0 %v2247
        %2286 = vmatprep.subr.mxu0 %v2250
        %2287 = vmatpush1.msra.mxu0 %v2249
        %2288 = vmatprep.subr.mxu0 %v2252
        %2289 = vmatpush1.msra.mxu0 %v2251
        %2290 = vmatprep.subr.mxu0 %v2254
        %2291 = vmatpush1.msra.mxu0 %v2253
        %2292 = vmatprep.subr.mxu0 %v2256
        %2293 = vmatpush1.msra.mxu0 %v2255
        %2294 = vmatprep.subr.mxu0 %v2258
        %2295 = vmatpush1.msra.mxu0 %v2257
        %2296 = vmatprep.subr.mxu0 %v2260
        %2297 = vmatpush1.msra.mxu0 %v2259
        %2298 = vmatprep.subr.mxu0 0.0
        %2299 = vmatpush1.msra.mxu0 0.0
        %2300 = vmatprep.subr.mxu0 0.0
        %2301 = vmatpush1.msra.mxu0 0.0
        %2302 = vmatprep.subr.mxu0 0.0
        %2303 = vmatpush1.msra.mxu0 0.0
        %2304 = vmatprep.subr.mxu0 0.0
        %2305 = vmatpush1.msra.mxu0 0.0
        %2306 = vmatprep.subr.mxu0 0.0
        %2307 = vmatpush1.msra.mxu0 0.0
        %2308 = vmatprep.subr.mxu0 0.0
        %2309 = vmatpush1.msra.mxu0 0.0
        %2310 = vmatprep.subr.mxu0 0.0
        %2311 = vmatpush1.msra.mxu0 0.0
        %2312 = vmatprep.subr.mxu0 0.0
        %2313 = vmatpush1.msra.mxu0 0.0
        %2314 = vmatprep.subr.mxu0 0.0
        %2315 = vmatpush1.msra.mxu0 0.0
        %2316 = vmatprep.subr.mxu0 0.0
        %2317 = vmatpush1.msra.mxu0 0.0
        %2318 = vmatprep.subr.mxu0 0.0
        %2319 = vmatpush1.msra.mxu0 0.0
        %2320 = vmatprep.subr.mxu0 0.0
        %2321 = vmatpush1.msra.mxu0 0.0
        %2322 = vmatprep.subr.mxu0 0.0
        %2323 = vmatpush1.msra.mxu0 0.0
        %2324 = vmatprep.subr.mxu0 0.0
        %2325 = vmatpush1.msra.mxu0 0.0
        %2326 = vmatprep.subr.mxu0 0.0
        %2327 = vmatpush1.msra.mxu0 0.0
        %2328 = vmatprep.subr.mxu0 0.0
        %2329 = vmatpush1.msra.mxu0 0.0
        %2330 = vmatprep.mubr.f32.mxu0 0.0
        %2331 = vmatmul.mubr.f32.gmra.mrb[0].mxu0 %v2261
        %v2332 = vpop.f32.mrb[0].mxu0
        %v2333 = vadd.f32 %v2264, %v2332
        %v2334 = vpop.f32.mrb[0].mxu0
        %v2335 = vadd.f32 %v2264, %v2334
        %2336 = vdwg.mxu0
        %v2339 = vrot.slane %v2333, 1
        %v2340 = vrot.slane %v2335, 1
        %v2343 = vmax.f32 %v2333, %v2339
        %v2344 = vmax.f32 %v2335, %v2340
        %v2345 = vrot.slane %v2333, 2
        %v2346 = vrot.slane %v2335, 2
        %v2349 = vmax.f32 %v2343, %v2345
        %v2350 = vmax.f32 %v2344, %v2346
        %v2351 = vrot.slane %v2333, 3
        %v2352 = vrot.slane %v2335, 3
        %v2355 = vmax.f32 %v2349, %v2351
        %v2356 = vmax.f32 %v2350, %v2352
        %v2357 = vsub.f32 %v2333, %v2355
        %v2358 = vsub.f32 %v2335, %v2356
        %v2359 = vmul.f32 %v2357, 1.442695
        %v2360 = vpow.pop %v2359
        %v2361 = vmul.f32 %v2358, 1.442695
        %v2362 = vpow.pop %v2361
        %v2365 = vrot.slane %v2355, 7
        %v2366 = vrot.slane %v2356, 7
        %v2369 = vsub.f32 %v2333, %v2365
        %v2370 = vsub.f32 %v2335, %v2366
        %v2371 = vmul.f32 %v2369, 1.442695
        %v2372 = vpow.pop %v2371
        %v2373 = vmul.f32 %v2370, 1.442695
        %v2374 = vpow.pop %v2373
        %v2375 = vrot.slane %v2355, 6
        %v2376 = vrot.slane %v2356, 6
        %v2379 = vsub.f32 %v2333, %v2375
        %v2380 = vsub.f32 %v2335, %v2376
        %v2381 = vmul.f32 %v2379, 1.442695
        %v2382 = vpow.pop %v2381
        %v2383 = vmul.f32 %v2380, 1.442695
        %v2384 = vpow.pop %v2383
        %v2385 = vrot.slane %v2355, 5
        %v2386 = vrot.slane %v2356, 5
        %v2389 = vsub.f32 %v2333, %v2385
        %v2390 = vsub.f32 %v2335, %v2386
        %v2391 = vmul.f32 %v2389, 1.442695
        %v2392 = vpow.pop %v2391
        %v2393 = vmul.f32 %v2390, 1.442695
        %v2394 = vpow.pop %v2393
        %v2397 = vrot.slane %v2360, 4
        %v2398 = vrot.slane %v2362, 4
        %v2401 = vmul.f32 %v2333, %v2397
        %v2402 = vmul.f32 %v2335, %v2398
        %v2405 = vrot.slane %v2372, 1
        %v2406 = vrot.slane %v2374, 1
        %v2409 = vadd.f32 %v2360, %v2405
        %v2410 = vadd.f32 %v2362, %v2406
        %v2411 = vrot.slane %v2372, 4
        %v2412 = vrot.slane %v2374, 4
        %v2415 = vmul.f32 %v2333, %v2411
        %v2416 = vmul.f32 %v2335, %v2412
        %v2419 = vrot.slane %v2415, 1
        %v2420 = vrot.slane %v2416, 1
        %v2423 = vadd.f32 %v2401, %v2419
        %v2424 = vadd.f32 %v2402, %v2420
        %v2427 = vrot.slane %v2382, 2
        %v2428 = vrot.slane %v2384, 2
        %v2431 = vadd.f32 %v2409, %v2427
        %v2432 = vadd.f32 %v2410, %v2428
        %v2433 = vrot.slane %v2382, 4
        %v2434 = vrot.slane %v2384, 4
        %v2437 = vmul.f32 %v2333, %v2433
        %v2438 = vmul.f32 %v2335, %v2434
        %v2441 = vrot.slane %v2437, 2
        %v2442 = vrot.slane %v2438, 2
        %v2445 = vadd.f32 %v2423, %v2441
        %v2446 = vadd.f32 %v2424, %v2442
        %v2449 = vrot.slane %v2392, 3
        %v2450 = vrot.slane %v2394, 3
        %v2453 = vadd.f32 %v2431, %v2449
        %v2454 = vadd.f32 %v2432, %v2450
        %v2455 = vrot.slane %v2392, 4
        %v2456 = vrot.slane %v2394, 4
        %v2459 = vmul.f32 %v2333, %v2455
        %v2460 = vmul.f32 %v2335, %v2456
        %v2463 = vrot.slane %v2459, 3
        %v2464 = vrot.slane %v2460, 3
        %v2467 = vadd.f32 %v2445, %v2463
        %v2468 = vadd.f32 %v2446, %v2464
        %v2471 = vrot.slane %v2453, 4
        %v2472 = vrot.slane %v2454, 4
        %v2475 = vrcp.pop %v2471
        %v2476 = vmul.f32 %v2467, %v2475
        %v2477 = vrcp.pop %v2472
        %v2478 = vmul.f32 %v2468, %v2477
        %v2481 = vcombine.low %v2476, %v2478
        %v2483 = vunpack.c.l.s4 1966171168
        %v2484 = vunpack.c.0.s8 %v2483
        %v2485 = vlaneseq
        %v2486 = vshrl.u32 %v2485, 7
        %v2487 = vsub.s32 %v2484, %v2486
        %v2488 = vrot.slane %v2481, %v2487
        %v2490 = vunpack.c.l.s4 1966171168
        %v2491 = vunpack.c.0.s8 %v2490
        %v2492 = vlaneseq
        %v2493 = vshrl.u32 %v2492, 7
        %v2494 = vsub.s32 %v2491, %v2493
        %v2495 = vrot.slane %v2488, %v2494
        %v2497 = vlaneseq
        %vm2498 = vcmp.ge.s32.totalorder %v2497, 0
        %vm2499 = vcmp.lt.s32.totalorder %v2497, 256
        %vm2500 = vmand %vm2498, %vm2499
        %2501 = vst.msk [vmem:[%s223] sm:$0x3] %vm2500, %v2495
        %s2502 = sand.u32 %s71, 1
        %s2503 = scalar_lea.sflag [#allocation4], %s2502
        %s2504 = sand.u32 %s71, 1
        %s2505 = smul.addr %s2504, 2
        %s2506 = scalar_lea.vmem [#allocation3], %s2505
        // Predicated region
        $region52: #{mh_racenet_branched.1} parent=46 // pred_check
          %p2507 = pneg %p81
        $region53: #{mh_racenet_branched.1} parent=46 // pred_check_branch
          %2509 = sbr.rel (%p2507) target = $region55
        $region54: #{mh_racenet_branched.1} parent=46 // pred_region
          %s2510 = smul.u32 2, %s16
          %s2512 = ssub.s32 32, 32
          %2513 = vsyncadd %s2503, %s2512
          %s2514 = smul.addr %s2510, 16
          %s2515 = scalar_lea.hbm %s2, %s2514
          %s2517 = sshll.u32 %s2506, 4
          %s2518 = int_to_ptr.vmem [resolvable:$true] %s2517
          %2520 = dma.vmem_to_hbm [thread:$0]  %s2518, 32, %s2515, %s2503
        $region55: #{mh_racenet_branched.1} parent=46 // pred_fallthru
          _
      $region47: #{mh_racenet_branched.1} parent=5 // pred_fallthru
        _
      %p2521 = scmp.le.s32.totalorder 2, %s11
      // Predicated region
      $region56: #{mh_racenet_branched.1} parent=5 // pred_check
        %p2522 = pneg %p2521
      $region57: #{mh_racenet_branched.1} parent=5 // pred_check_branch
        %2524 = sbr.rel (%p2522) target = $region59
      $region58: #{mh_racenet_branched.1} parent=5 // pred_region
        %s2525 = ssub.s32 %s11, 2
        // Predicated region
        $region60: #{mh_racenet_branched.1} parent=58 // pred_check
          %p2526 = pneg %p87
        $region61: #{mh_racenet_branched.1} parent=58 // pred_check_branch
          %2528 = sbr.rel (%p2526) target = $region63
        $region62: #{mh_racenet_branched.1} parent=58 // pred_region
          %s2529 = sand.u32 %s72, 1
          %s2530 = scalar_lea.sflag [#allocation4], %s2529
          %s2531 = sand.u32 %s72, 1
          %s2532 = smul.addr %s2531, 2
          %s2533 = scalar_lea.vmem [#allocation3], %s2532
          %2534 = dma.done %s2530, 32
        $region63: #{mh_racenet_branched.1} parent=58 // pred_fallthru
          _
      $region59: #{mh_racenet_branched.1} parent=5 // pred_fallthru
        _
    $region6: #{mh_racenet_branched.1} parent=1 // loop_footer
      %s15 = sadd.s32 1, %s11
    $region7: #{mh_racenet_branched.1} parent=1 // loop_footer_branch
      %10 = sbr.rel target = $region3
    $region8: #{mh_racenet_branched.1} parent=1 // loop_exit
      _
    %2535 = vsyncpa [#allocation4], 1
    %s2536 = scalar_lea.sflag [#allocation4], 1
    %2537 = vsyncpa %s2536, 1

</llo_original>
